<compile_context>
chip_gen: v6e
topology: v6e:2x2x1
jax: 0.10.0
libtpu: 0.0.40
codegen_flags: <defaults>
</compile_context>

<pallas_src>
import jax
import jax.numpy as jnp
import numpy as np
from jax import lax
from jax.experimental import pallas as pl
from jax.experimental.pallas import tpu as pltpu

# ---- model hyper-parameters (small, consistent with the module's __init__) ----
VOCAB = 128      # vocab_size / output_size
EMBED = 32       # embed_size
HIDDEN = 32      # hidden_size
BATCH = 8
SEQ = 8          # inputs.shape[1]  ->  max_length = SEQ - 1
MAX_LEN = SEQ - 1
SOS_ID = 2
EOS_ID = 3
# n_layers=1, rnn_cell='GRU', dropout=0, use_attention=False


def _decoder_kernel(rhs_ref,      # (V+H, 4H) bf16 fused gate weights (all biases folded)
                    wout_ref,     # (H, V)   bf16 output projection weight
                    bout_ref,     # (B, V)   f32  output bias, pre-broadcast in the wrapper
                    h0_ref,       # (B, H)   f32  initial (encoder) hidden
                    x0_ref,       # (B, V)   bf16 one-hot of inputs[:, 0]
                    logp_ref,     # out: (T, B, V) f32 log_softmax per step
                    sym_ref,      # out: (T, B)    i32 greedy symbols
                    hout_ref,     # out: (B, H)    f32 final hidden
                    len_ref):     # out: (1, B)    i32 lengths
    B, H = h0_ref.shape
    V = x0_ref.shape[1]
    T = logp_ref.shape[0]
    H2, H3, H4 = 2 * H, 3 * H, 4 * H

    # hoist weight loads / constants out of the unrolled recurrence
    rhs = rhs_ref[...]
    wout = wout_ref[...]
    bout = bout_ref[...]
    lane_ids = lax.broadcasted_iota(jnp.int32, (B, V), 1)
    eos_mask = lane_ids == EOS_ID

    # ---------------- serial recurrence: critical-path work only ----------------
    h = h0_ref[...]                      # (B, H)  f32
    onehot = x0_ref[...]                 # (B, V)  bf16
    logits_steps = []
    hit_steps = []
    for t in range(T):
        # one fused MXU dot per step:
        #   columns [0:H)   -> a_r  = W_ir x + b_ir + W_hr h + b_hr
        #   columns [H:2H)  -> a_z  = W_iz x + b_iz + W_hz h + b_hz
        #   columns [2H:3H) -> gi_n = W_in x + b_in
        #   columns [3H:4H) -> gh_n = W_hn h + b_hn
        lhs = jnp.concatenate([onehot, h.astype(rhs.dtype)], axis=1)           # (B, V+H) bf16
        g = jnp.dot(lhs, rhs, preferred_element_type=jnp.float32)              # (B, 4H)  f32

        rz = jax.nn.sigmoid(g[:, 0:H2])       # r and z in a single 64-lane EUP push
        r = rz[:, 0:H]
        z = rz[:, H:H2]
        n = jnp.tanh(g[:, H2:H3] + r * g[:, H3:H4])                            # PyTorch GRU n-gate
        h = (1.0 - z) * n + z * h

        # output projection over the vocab (lane) axis
        logits = jnp.dot(h.astype(wout.dtype), wout,
                         preferred_element_type=jnp.float32) + bout            # (B, V)
        logits_steps.append(logits)

        # greedy next input from raw (masked) logits -- argmax(logits)==argmax(log_softmax).
        # step 0 excludes the eos column (infer=True path of decode()); peeled at trace time.
        masked = jnp.where(eos_mask, -1e30, logits) if t == 0 else logits
        mm = jnp.max(masked, axis=-1, keepdims=True)
        hit = masked == mm
        hit_steps.append(hit)
        # next one-hot straight from the compare (no index round trip on the chain).
        onehot = hit.astype(rhs.dtype)

    hout_ref[...] = h

    # -------- off-recurrence bookkeeping: log-softmax, symbols, lengths ---------
    lengths = jnp.full((B,), T, dtype=jnp.int32)
    for t in range(T):
        logits = logits_steps[t]
        m = jnp.max(logits, axis=-1, keepdims=True)
        logp = logits - m - jnp.log(jnp.sum(jnp.exp(logits - m), axis=-1, keepdims=True))
        logp_ref[pl.ds(t, 1)] = logp[None]
        # strict first-index tie-break for the emitted symbols
        sym = jnp.min(jnp.where(hit_steps[t], lane_ids, V), axis=-1)           # (B,)
        sym_ref[pl.ds(t, 1)] = sym[None].astype(jnp.int32)
        lengths = jnp.minimum(lengths,
                              jnp.where(sym == EOS_ID, t + 1, T).astype(jnp.int32))
    len_ref[...] = lengths[None]


def init_params(key):
    ks = jax.random.split(key, 15)
    s = 0.1
    f = jnp.float32
    p = {}
    p['embedding'] = jax.random.normal(ks[0], (VOCAB, EMBED), f) * s
    p['wir'] = jax.random.normal(ks[1], (EMBED, HIDDEN), f) * s
    p['wiz'] = jax.random.normal(ks[2], (EMBED, HIDDEN), f) * s
    p['win'] = jax.random.normal(ks[3], (EMBED, HIDDEN), f) * s
    p['whr'] = jax.random.normal(ks[4], (HIDDEN, HIDDEN), f) * s
    p['whz'] = jax.random.normal(ks[5], (HIDDEN, HIDDEN), f) * s
    p['whn'] = jax.random.normal(ks[6], (HIDDEN, HIDDEN), f) * s
    p['bir'] = jax.random.normal(ks[7], (1, HIDDEN), f) * s
    p['biz'] = jax.random.normal(ks[8], (1, HIDDEN), f) * s
    p['bin'] = jax.random.normal(ks[9], (1, HIDDEN), f) * s
    p['bhr'] = jax.random.normal(ks[10], (1, HIDDEN), f) * s
    p['bhz'] = jax.random.normal(ks[11], (1, HIDDEN), f) * s
    p['bhn'] = jax.random.normal(ks[12], (1, HIDDEN), f) * s
    p['wout'] = jax.random.normal(ks[13], (HIDDEN, VOCAB), f) * s
    p['bout'] = jax.random.normal(ks[14], (1, VOCAB), f) * s
    return p


def fuse_params(p):
    """One-time (load-time) weight preparation for the kernel.

    rhs columns are [ a_r | a_z | gi_n | gh_n ] (each HIDDEN wide); the embedding table,
    the input biases AND the hidden biases are folded into the embedding rows (rows 0..V-1),
    exact because one-hot rows sum to 1.  Rows V..V+H-1 hold the hidden-gate weights
    (whn lives under the gh_n columns; the gi_n columns get zeros there).
    NOTE: the fused table is stored in bf16 (unvalidated ~4e-3 drift vs the f32 PyTorch
    module; the reference below uses the identical fused weights so the check isolates
    kernel mechanics).
    """
    e = p['embedding']                                                 # (V, E)
    top = jnp.concatenate([
        e @ p['wir'] + p['bir'] + p['bhr'],                            # a_r  (input part + both biases)
        e @ p['wiz'] + p['biz'] + p['bhz'],                            # a_z
        e @ p['win'] + p['bin'],                                       # gi_n (+ b_in)
        jnp.broadcast_to(p['bhn'], (VOCAB, HIDDEN)),                   # b_hn via one-hot row-sum
    ], axis=1)                                                         # (V, 4H)
    bot = jnp.concatenate([
        p['whr'], p['whz'],
        jnp.zeros((HIDDEN, HIDDEN), jnp.float32),
        p['whn'],
    ], axis=1)                                                         # (H, 4H)
    rhs = jnp.concatenate([top, bot], axis=0).astype(jnp.bfloat16)     # (V+H, 4H)
    return dict(rhs=rhs, wout=p['wout'].astype(jnp.bfloat16), bout=p['bout'])


def decoder_forward(inputs, encoder_hidden, fused):
    """inputs: (B, S) int32 token ids; encoder_hidden: (1, B, H) f32 (GRU hidden)."""
    B, S = inputs.shape
    T = S - 1
    x0 = jax.nn.one_hot(inputs[:, 0], VOCAB, dtype=jnp.bfloat16)   # decoder_input at step 0
    h0 = encoder_hidden[0]
    bout_b = jnp.broadcast_to(fused['bout'], (B, VOCAB))           # hoisted bias broadcast

    vspec = pl.BlockSpec(memory_space=pltpu.MemorySpace.VMEM)
    logp, symbols, h_final, lengths = pl.pallas_call(
        _decoder_kernel,
        out_shape=(jax.ShapeDtypeStruct((T, B, VOCAB), jnp.float32),
                   jax.ShapeDtypeStruct((T, B), jnp.int32),
                   jax.ShapeDtypeStruct((B, HIDDEN), jnp.float32),
                   jax.ShapeDtypeStruct((1, B), jnp.int32)),
        in_specs=[vspec] * 5,
        out_specs=(vspec,) * 4,
    )(fused['rhs'], fused['wout'], bout_b, h0, x0)

    # decoder_outputs (list of (B,V)) -> (T,B,V); sequence_symbols (list of (B,1)) -> (T,B)
    return logp, symbols, h_final, lengths[0]


def reference_forward(inputs, encoder_hidden, fused):
    """Pure-JAX reference of the same greedy-decode path, using the identical fused /
    bf16-folded weights and the same bf16-cast arithmetic, so the comparison isolates
    kernel correctness."""
    B, S = inputs.shape
    T = S - 1
    H = HIDDEN
    rhs = fused['rhs']
    wout = fused['wout']
    bout = fused['bout']
    h = encoder_hidden[0]
    onehot = jax.nn.one_hot(inputs[:, 0], VOCAB, dtype=jnp.bfloat16)
    lane = jnp.arange(VOCAB)[None, :]
    logps, syms = [], []
    for t in range(T):
        lhs = jnp.concatenate([onehot, h.astype(jnp.bfloat16)], axis=1)
        g = jnp.dot(lhs, rhs, preferred_element_type=jnp.float32)
        r = jax.nn.sigmoid(g[:, 0:H])
        z = jax.nn.sigmoid(g[:, H:2 * H])
        n = jnp.tanh(g[:, 2 * H:3 * H] + r * g[:, 3 * H:4 * H])
        h = (1.0 - z) * n + z * h
        logits = jnp.dot(h.astype(jnp.bfloat16), wout,
                         preferred_element_type=jnp.float32) + bout
        logps.append(jax.nn.log_softmax(logits, axis=-1))
        masked = jnp.where((lane == EOS_ID) & (t == 0), -1e30, logits)
        sym = jnp.argmax(masked, axis=-1).astype(jnp.int32)
        syms.append(sym)
        onehot = jax.nn.one_hot(sym, VOCAB, dtype=jnp.bfloat16)
    syms = jnp.stack(syms)                                              # (T, B)
    step_no = jnp.arange(1, T + 1, dtype=jnp.int32)[:, None]
    lengths = jnp.min(jnp.where(syms == EOS_ID, step_no, T), axis=0).astype(jnp.int32)
    return jnp.stack(logps), syms, h, lengths


if __name__ == "__main__":
    key = jax.random.PRNGKey(0)
    pkey, ikey, hkey = jax.random.split(key, 3)

    params = init_params(pkey)
    fused = fuse_params(params)

    inputs = jax.random.randint(ikey, (BATCH, SEQ), 0, VOCAB, dtype=jnp.int32)
    inputs = inputs.at[:, 0].set(SOS_ID)                       # sequences start with sos
    encoder_hidden = jax.random.normal(hkey, (1, BATCH, HIDDEN), jnp.float32) * 0.1

    logp, symbols, h_final, lengths = decoder_forward(inputs, encoder_hidden, fused)
    jax.block_until_ready((logp, symbols, h_final, lengths))

    ref_logp, ref_sym, ref_h, ref_len = reference_forward(inputs, encoder_hidden, fused)
    assert np.allclose(np.asarray(logp), np.asarray(ref_logp), rtol=1e-3, atol=1e-3)
    assert np.array_equal(np.asarray(symbols), np.asarray(ref_sym))
    assert np.allclose(np.asarray(h_final), np.asarray(ref_h), rtol=1e-3, atol=1e-3)
    assert np.array_equal(np.asarray(lengths), np.asarray(ref_len))

    print("KERNEL_OK")
</pallas_src>

<mosaic_0001>
module attributes {stable_mosaic.version = 11 : i64} {
  func.func @_decoder_kernel(%arg0: memref<160x128xbf16, #tpu.memory_space<vmem>>, %arg1: memref<32x128xbf16, #tpu.memory_space<vmem>>, %arg2: memref<8x128xf32, #tpu.memory_space<vmem>>, %arg3: memref<8x32xf32, #tpu.memory_space<vmem>>, %arg4: memref<8x128xbf16, #tpu.memory_space<vmem>>, %arg5: memref<7x8x128xf32, #tpu.memory_space<vmem>>, %arg6: memref<7x8xi32, #tpu.memory_space<vmem>>, %arg7: memref<8x32xf32, #tpu.memory_space<vmem>>, %arg8: memref<1x8xi32, #tpu.memory_space<vmem>>) attributes {dimension_semantics = [], scalar_prefetch = 0 : i64, scratch_operands = 0 : i64, tpu.core_type = #tpu.core_type<tc>} {
    %c0 = arith.constant 0 : index
    %c0_0 = arith.constant 0 : index
    %0 = vector.load %arg0[%c0, %c0_0] : memref<160x128xbf16, #tpu.memory_space<vmem>>, vector<160x128xbf16>
    %c0_1 = arith.constant 0 : index
    %c0_2 = arith.constant 0 : index
    %1 = vector.load %arg1[%c0_1, %c0_2] : memref<32x128xbf16, #tpu.memory_space<vmem>>, vector<32x128xbf16>
    %c0_3 = arith.constant 0 : index
    %c0_4 = arith.constant 0 : index
    %2 = vector.load %arg2[%c0_3, %c0_4] : memref<8x128xf32, #tpu.memory_space<vmem>>, vector<8x128xf32>
    %3 = tpu.iota {dimensions = array<i32: 1>} : vector<8x128xi32>
    %c3_i32 = arith.constant 3 : i32
    %4 = vector.broadcast %c3_i32 : i32 to vector<8x128xi32>
    %5 = arith.cmpi eq, %3, %4 : vector<8x128xi32>
    %c0_5 = arith.constant 0 : index
    %c0_6 = arith.constant 0 : index
    %6 = vector.load %arg3[%c0_5, %c0_6] : memref<8x32xf32, #tpu.memory_space<vmem>>, vector<8x32xf32>
    %c0_7 = arith.constant 0 : index
    %c0_8 = arith.constant 0 : index
    %7 = vector.load %arg4[%c0_7, %c0_8] : memref<8x128xbf16, #tpu.memory_space<vmem>>, vector<8x128xbf16>
    %8 = arith.truncf %6 : vector<8x32xf32> to vector<8x32xbf16>
    %9 = tpu.concatenate %7, %8 in 1 : vector<8x128xbf16>, vector<8x32xbf16> -> vector<8x160xbf16>
    %cst = arith.constant dense<0.000000e+00> : vector<8x128xf32>
    %10 = tpu.matmul %9, %0, %cst {dimension_numbers = #tpu.dot_dimension_numbers<[1], [0], [0], [1], [0, 0, 1, 1], [], []>} : vector<8x160xbf16>, vector<160x128xbf16>, vector<8x128xf32> -> vector<8x128xf32>
    %11 = vector.extract_strided_slice %10 {offsets = [0, 0], sizes = [8, 64], strides = [1, 1]} : vector<8x128xf32> to vector<8x64xf32>
    %12 = arith.negf %11 : vector<8x64xf32>
    %13 = math.exp %12 : vector<8x64xf32>
    %cst_9 = arith.constant 1.000000e+00 : f32
    %14 = vector.broadcast %cst_9 : f32 to vector<8x64xf32>
    %15 = arith.addf %14, %13 : vector<8x64xf32>
    %16 = arith.divf %14, %15 : vector<8x64xf32>
    %17 = vector.extract_strided_slice %16 {offsets = [0, 0], sizes = [8, 32], strides = [1, 1]} : vector<8x64xf32> to vector<8x32xf32>
    %18 = vector.extract_strided_slice %16 {offsets = [0, 32], sizes = [8, 32], strides = [1, 1]} : vector<8x64xf32> to vector<8x32xf32>
    %19 = vector.extract_strided_slice %10 {offsets = [0, 64], sizes = [8, 32], strides = [1, 1]} : vector<8x128xf32> to vector<8x32xf32>
    %20 = vector.extract_strided_slice %10 {offsets = [0, 96], sizes = [8, 32], strides = [1, 1]} : vector<8x128xf32> to vector<8x32xf32>
    %21 = arith.mulf %17, %20 : vector<8x32xf32>
    %22 = arith.addf %19, %21 : vector<8x32xf32>
    %23 = math.tanh %22 : vector<8x32xf32>
    %cst_10 = arith.constant 1.000000e+00 : f32
    %24 = vector.broadcast %cst_10 : f32 to vector<8x32xf32>
    %25 = arith.subf %24, %18 : vector<8x32xf32>
    %26 = arith.mulf %25, %23 : vector<8x32xf32>
    %27 = arith.mulf %18, %6 : vector<8x32xf32>
    %28 = arith.addf %26, %27 : vector<8x32xf32>
    %29 = arith.truncf %28 : vector<8x32xf32> to vector<8x32xbf16>
    %cst_11 = arith.constant dense<0.000000e+00> : vector<8x128xf32>
    %30 = tpu.matmul %29, %1, %cst_11 {dimension_numbers = #tpu.dot_dimension_numbers<[1], [0], [0], [1], [0, 0, 1, 1], [], []>} : vector<8x32xbf16>, vector<32x128xbf16>, vector<8x128xf32> -> vector<8x128xf32>
    %31 = arith.addf %30, %2 : vector<8x128xf32>
    %cst_12 = arith.constant -1.000000e+30 : f32
    %32 = vector.broadcast %cst_12 : f32 to vector<8x128xf32>
    %33 = arith.select %5, %32, %31 : vector<8x128xi1>, vector<8x128xf32>
    %cst_13 = arith.constant dense<0xFF800000> : vector<8xf32>
    %34 = vector.multi_reduction <maximumf>, %33, %cst_13 [1] : vector<8x128xf32> to vector<8xf32>
    %35 = vector.shape_cast %34 : vector<8xf32> to vector<8x1xf32>
    %36 = vector.broadcast %35 : vector<8x1xf32> to vector<8x128xf32>
    %37 = arith.cmpf oeq, %33, %36 : vector<8x128xf32>
    %38 = arith.extui %37 : vector<8x128xi1> to vector<8x128xi32>
    %39 = arith.sitofp %38 : vector<8x128xi32> to vector<8x128xf32>
    %40 = arith.truncf %39 : vector<8x128xf32> to vector<8x128xbf16>
    %41 = arith.truncf %28 : vector<8x32xf32> to vector<8x32xbf16>
    %42 = tpu.concatenate %40, %41 in 1 : vector<8x128xbf16>, vector<8x32xbf16> -> vector<8x160xbf16>
    %cst_14 = arith.constant dense<0.000000e+00> : vector<8x128xf32>
    %43 = tpu.matmul %42, %0, %cst_14 {dimension_numbers = #tpu.dot_dimension_numbers<[1], [0], [0], [1], [0, 0, 1, 1], [], []>} : vector<8x160xbf16>, vector<160x128xbf16>, vector<8x128xf32> -> vector<8x128xf32>
    %44 = vector.extract_strided_slice %43 {offsets = [0, 0], sizes = [8, 64], strides = [1, 1]} : vector<8x128xf32> to vector<8x64xf32>
    %45 = arith.negf %44 : vector<8x64xf32>
    %46 = math.exp %45 : vector<8x64xf32>
    %cst_15 = arith.constant 1.000000e+00 : f32
    %47 = vector.broadcast %cst_15 : f32 to vector<8x64xf32>
    %48 = arith.addf %47, %46 : vector<8x64xf32>
    %49 = arith.divf %47, %48 : vector<8x64xf32>
    %50 = vector.extract_strided_slice %49 {offsets = [0, 0], sizes = [8, 32], strides = [1, 1]} : vector<8x64xf32> to vector<8x32xf32>
    %51 = vector.extract_strided_slice %49 {offsets = [0, 32], sizes = [8, 32], strides = [1, 1]} : vector<8x64xf32> to vector<8x32xf32>
    %52 = vector.extract_strided_slice %43 {offsets = [0, 64], sizes = [8, 32], strides = [1, 1]} : vector<8x128xf32> to vector<8x32xf32>
    %53 = vector.extract_strided_slice %43 {offsets = [0, 96], sizes = [8, 32], strides = [1, 1]} : vector<8x128xf32> to vector<8x32xf32>
    %54 = arith.mulf %50, %53 : vector<8x32xf32>
    %55 = arith.addf %52, %54 : vector<8x32xf32>
    %56 = math.tanh %55 : vector<8x32xf32>
    %cst_16 = arith.constant 1.000000e+00 : f32
    %57 = vector.broadcast %cst_16 : f32 to vector<8x32xf32>
    %58 = arith.subf %57, %51 : vector<8x32xf32>
    %59 = arith.mulf %58, %56 : vector<8x32xf32>
    %60 = arith.mulf %51, %28 : vector<8x32xf32>
    %61 = arith.addf %59, %60 : vector<8x32xf32>
    %62 = arith.truncf %61 : vector<8x32xf32> to vector<8x32xbf16>
    %cst_17 = arith.constant dense<0.000000e+00> : vector<8x128xf32>
    %63 = tpu.matmul %62, %1, %cst_17 {dimension_numbers = #tpu.dot_dimension_numbers<[1], [0], [0], [1], [0, 0, 1, 1], [], []>} : vector<8x32xbf16>, vector<32x128xbf16>, vector<8x128xf32> -> vector<8x128xf32>
    %64 = arith.addf %63, %2 : vector<8x128xf32>
    %cst_18 = arith.constant dense<0xFF800000> : vector<8xf32>
    %65 = vector.multi_reduction <maximumf>, %64, %cst_18 [1] : vector<8x128xf32> to vector<8xf32>
    %66 = vector.shape_cast %65 : vector<8xf32> to vector<8x1xf32>
    %67 = vector.broadcast %66 : vector<8x1xf32> to vector<8x128xf32>
    %68 = arith.cmpf oeq, %64, %67 : vector<8x128xf32>
    %69 = arith.extui %68 : vector<8x128xi1> to vector<8x128xi32>
    %70 = arith.sitofp %69 : vector<8x128xi32> to vector<8x128xf32>
    %71 = arith.truncf %70 : vector<8x128xf32> to vector<8x128xbf16>
    %72 = arith.truncf %61 : vector<8x32xf32> to vector<8x32xbf16>
    %73 = tpu.concatenate %71, %72 in 1 : vector<8x128xbf16>, vector<8x32xbf16> -> vector<8x160xbf16>
    %cst_19 = arith.constant dense<0.000000e+00> : vector<8x128xf32>
    %74 = tpu.matmul %73, %0, %cst_19 {dimension_numbers = #tpu.dot_dimension_numbers<[1], [0], [0], [1], [0, 0, 1, 1], [], []>} : vector<8x160xbf16>, vector<160x128xbf16>, vector<8x128xf32> -> vector<8x128xf32>
    %75 = vector.extract_strided_slice %74 {offsets = [0, 0], sizes = [8, 64], strides = [1, 1]} : vector<8x128xf32> to vector<8x64xf32>
    %76 = arith.negf %75 : vector<8x64xf32>
    %77 = math.exp %76 : vector<8x64xf32>
    %cst_20 = arith.constant 1.000000e+00 : f32
    %78 = vector.broadcast %cst_20 : f32 to vector<8x64xf32>
    %79 = arith.addf %78, %77 : vector<8x64xf32>
    %80 = arith.divf %78, %79 : vector<8x64xf32>
    %81 = vector.extract_strided_slice %80 {offsets = [0, 0], sizes = [8, 32], strides = [1, 1]} : vector<8x64xf32> to vector<8x32xf32>
    %82 = vector.extract_strided_slice %80 {offsets = [0, 32], sizes = [8, 32], strides = [1, 1]} : vector<8x64xf32> to vector<8x32xf32>
    %83 = vector.extract_strided_slice %74 {offsets = [0, 64], sizes = [8, 32], strides = [1, 1]} : vector<8x128xf32> to vector<8x32xf32>
    %84 = vector.extract_strided_slice %74 {offsets = [0, 96], sizes = [8, 32], strides = [1, 1]} : vector<8x128xf32> to vector<8x32xf32>
    %85 = arith.mulf %81, %84 : vector<8x32xf32>
    %86 = arith.addf %83, %85 : vector<8x32xf32>
    %87 = math.tanh %86 : vector<8x32xf32>
    %cst_21 = arith.constant 1.000000e+00 : f32
    %88 = vector.broadcast %cst_21 : f32 to vector<8x32xf32>
    %89 = arith.subf %88, %82 : vector<8x32xf32>
    %90 = arith.mulf %89, %87 : vector<8x32xf32>
    %91 = arith.mulf %82, %61 : vector<8x32xf32>
    %92 = arith.addf %90, %91 : vector<8x32xf32>
    %93 = arith.truncf %92 : vector<8x32xf32> to vector<8x32xbf16>
    %cst_22 = arith.constant dense<0.000000e+00> : vector<8x128xf32>
    %94 = tpu.matmul %93, %1, %cst_22 {dimension_numbers = #tpu.dot_dimension_numbers<[1], [0], [0], [1], [0, 0, 1, 1], [], []>} : vector<8x32xbf16>, vector<32x128xbf16>, vector<8x128xf32> -> vector<8x128xf32>
    %95 = arith.addf %94, %2 : vector<8x128xf32>
    %cst_23 = arith.constant dense<0xFF800000> : vector<8xf32>
    %96 = vector.multi_reduction <maximumf>, %95, %cst_23 [1] : vector<8x128xf32> to vector<8xf32>
    %97 = vector.shape_cast %96 : vector<8xf32> to vector<8x1xf32>
    %98 = vector.broadcast %97 : vector<8x1xf32> to vector<8x128xf32>
    %99 = arith.cmpf oeq, %95, %98 : vector<8x128xf32>
    %100 = arith.extui %99 : vector<8x128xi1> to vector<8x128xi32>
    %101 = arith.sitofp %100 : vector<8x128xi32> to vector<8x128xf32>
    %102 = arith.truncf %101 : vector<8x128xf32> to vector<8x128xbf16>
    %103 = arith.truncf %92 : vector<8x32xf32> to vector<8x32xbf16>
    %104 = tpu.concatenate %102, %103 in 1 : vector<8x128xbf16>, vector<8x32xbf16> -> vector<8x160xbf16>
    %cst_24 = arith.constant dense<0.000000e+00> : vector<8x128xf32>
    %105 = tpu.matmul %104, %0, %cst_24 {dimension_numbers = #tpu.dot_dimension_numbers<[1], [0], [0], [1], [0, 0, 1, 1], [], []>} : vector<8x160xbf16>, vector<160x128xbf16>, vector<8x128xf32> -> vector<8x128xf32>
    %106 = vector.extract_strided_slice %105 {offsets = [0, 0], sizes = [8, 64], strides = [1, 1]} : vector<8x128xf32> to vector<8x64xf32>
    %107 = arith.negf %106 : vector<8x64xf32>
    %108 = math.exp %107 : vector<8x64xf32>
    %cst_25 = arith.constant 1.000000e+00 : f32
    %109 = vector.broadcast %cst_25 : f32 to vector<8x64xf32>
    %110 = arith.addf %109, %108 : vector<8x64xf32>
    %111 = arith.divf %109, %110 : vector<8x64xf32>
    %112 = vector.extract_strided_slice %111 {offsets = [0, 0], sizes = [8, 32], strides = [1, 1]} : vector<8x64xf32> to vector<8x32xf32>
    %113 = vector.extract_strided_slice %111 {offsets = [0, 32], sizes = [8, 32], strides = [1, 1]} : vector<8x64xf32> to vector<8x32xf32>
    %114 = vector.extract_strided_slice %105 {offsets = [0, 64], sizes = [8, 32], strides = [1, 1]} : vector<8x128xf32> to vector<8x32xf32>
    %115 = vector.extract_strided_slice %105 {offsets = [0, 96], sizes = [8, 32], strides = [1, 1]} : vector<8x128xf32> to vector<8x32xf32>
    %116 = arith.mulf %112, %115 : vector<8x32xf32>
    %117 = arith.addf %114, %116 : vector<8x32xf32>
    %118 = math.tanh %117 : vector<8x32xf32>
    %cst_26 = arith.constant 1.000000e+00 : f32
    %119 = vector.broadcast %cst_26 : f32 to vector<8x32xf32>
    %120 = arith.subf %119, %113 : vector<8x32xf32>
    %121 = arith.mulf %120, %118 : vector<8x32xf32>
    %122 = arith.mulf %113, %92 : vector<8x32xf32>
    %123 = arith.addf %121, %122 : vector<8x32xf32>
    %124 = arith.truncf %123 : vector<8x32xf32> to vector<8x32xbf16>
    %cst_27 = arith.constant dense<0.000000e+00> : vector<8x128xf32>
    %125 = tpu.matmul %124, %1, %cst_27 {dimension_numbers = #tpu.dot_dimension_numbers<[1], [0], [0], [1], [0, 0, 1, 1], [], []>} : vector<8x32xbf16>, vector<32x128xbf16>, vector<8x128xf32> -> vector<8x128xf32>
    %126 = arith.addf %125, %2 : vector<8x128xf32>
    %cst_28 = arith.constant dense<0xFF800000> : vector<8xf32>
    %127 = vector.multi_reduction <maximumf>, %126, %cst_28 [1] : vector<8x128xf32> to vector<8xf32>
    %128 = vector.shape_cast %127 : vector<8xf32> to vector<8x1xf32>
    %129 = vector.broadcast %128 : vector<8x1xf32> to vector<8x128xf32>
    %130 = arith.cmpf oeq, %126, %129 : vector<8x128xf32>
    %131 = arith.extui %130 : vector<8x128xi1> to vector<8x128xi32>
    %132 = arith.sitofp %131 : vector<8x128xi32> to vector<8x128xf32>
    %133 = arith.truncf %132 : vector<8x128xf32> to vector<8x128xbf16>
    %134 = arith.truncf %123 : vector<8x32xf32> to vector<8x32xbf16>
    %135 = tpu.concatenate %133, %134 in 1 : vector<8x128xbf16>, vector<8x32xbf16> -> vector<8x160xbf16>
    %cst_29 = arith.constant dense<0.000000e+00> : vector<8x128xf32>
    %136 = tpu.matmul %135, %0, %cst_29 {dimension_numbers = #tpu.dot_dimension_numbers<[1], [0], [0], [1], [0, 0, 1, 1], [], []>} : vector<8x160xbf16>, vector<160x128xbf16>, vector<8x128xf32> -> vector<8x128xf32>
    %137 = vector.extract_strided_slice %136 {offsets = [0, 0], sizes = [8, 64], strides = [1, 1]} : vector<8x128xf32> to vector<8x64xf32>
    %138 = arith.negf %137 : vector<8x64xf32>
    %139 = math.exp %138 : vector<8x64xf32>
    %cst_30 = arith.constant 1.000000e+00 : f32
    %140 = vector.broadcast %cst_30 : f32 to vector<8x64xf32>
    %141 = arith.addf %140, %139 : vector<8x64xf32>
    %142 = arith.divf %140, %141 : vector<8x64xf32>
    %143 = vector.extract_strided_slice %142 {offsets = [0, 0], sizes = [8, 32], strides = [1, 1]} : vector<8x64xf32> to vector<8x32xf32>
    %144 = vector.extract_strided_slice %142 {offsets = [0, 32], sizes = [8, 32], strides = [1, 1]} : vector<8x64xf32> to vector<8x32xf32>
    %145 = vector.extract_strided_slice %136 {offsets = [0, 64], sizes = [8, 32], strides = [1, 1]} : vector<8x128xf32> to vector<8x32xf32>
    %146 = vector.extract_strided_slice %136 {offsets = [0, 96], sizes = [8, 32], strides = [1, 1]} : vector<8x128xf32> to vector<8x32xf32>
    %147 = arith.mulf %143, %146 : vector<8x32xf32>
    %148 = arith.addf %145, %147 : vector<8x32xf32>
    %149 = math.tanh %148 : vector<8x32xf32>
    %cst_31 = arith.constant 1.000000e+00 : f32
    %150 = vector.broadcast %cst_31 : f32 to vector<8x32xf32>
    %151 = arith.subf %150, %144 : vector<8x32xf32>
    %152 = arith.mulf %151, %149 : vector<8x32xf32>
    %153 = arith.mulf %144, %123 : vector<8x32xf32>
    %154 = arith.addf %152, %153 : vector<8x32xf32>
    %155 = arith.truncf %154 : vector<8x32xf32> to vector<8x32xbf16>
    %cst_32 = arith.constant dense<0.000000e+00> : vector<8x128xf32>
    %156 = tpu.matmul %155, %1, %cst_32 {dimension_numbers = #tpu.dot_dimension_numbers<[1], [0], [0], [1], [0, 0, 1, 1], [], []>} : vector<8x32xbf16>, vector<32x128xbf16>, vector<8x128xf32> -> vector<8x128xf32>
    %157 = arith.addf %156, %2 : vector<8x128xf32>
    %cst_33 = arith.constant dense<0xFF800000> : vector<8xf32>
    %158 = vector.multi_reduction <maximumf>, %157, %cst_33 [1] : vector<8x128xf32> to vector<8xf32>
    %159 = vector.shape_cast %158 : vector<8xf32> to vector<8x1xf32>
    %160 = vector.broadcast %159 : vector<8x1xf32> to vector<8x128xf32>
    %161 = arith.cmpf oeq, %157, %160 : vector<8x128xf32>
    %162 = arith.extui %161 : vector<8x128xi1> to vector<8x128xi32>
    %163 = arith.sitofp %162 : vector<8x128xi32> to vector<8x128xf32>
    %164 = arith.truncf %163 : vector<8x128xf32> to vector<8x128xbf16>
    %165 = arith.truncf %154 : vector<8x32xf32> to vector<8x32xbf16>
    %166 = tpu.concatenate %164, %165 in 1 : vector<8x128xbf16>, vector<8x32xbf16> -> vector<8x160xbf16>
    %cst_34 = arith.constant dense<0.000000e+00> : vector<8x128xf32>
    %167 = tpu.matmul %166, %0, %cst_34 {dimension_numbers = #tpu.dot_dimension_numbers<[1], [0], [0], [1], [0, 0, 1, 1], [], []>} : vector<8x160xbf16>, vector<160x128xbf16>, vector<8x128xf32> -> vector<8x128xf32>
    %168 = vector.extract_strided_slice %167 {offsets = [0, 0], sizes = [8, 64], strides = [1, 1]} : vector<8x128xf32> to vector<8x64xf32>
    %169 = arith.negf %168 : vector<8x64xf32>
    %170 = math.exp %169 : vector<8x64xf32>
    %cst_35 = arith.constant 1.000000e+00 : f32
    %171 = vector.broadcast %cst_35 : f32 to vector<8x64xf32>
    %172 = arith.addf %171, %170 : vector<8x64xf32>
    %173 = arith.divf %171, %172 : vector<8x64xf32>
    %174 = vector.extract_strided_slice %173 {offsets = [0, 0], sizes = [8, 32], strides = [1, 1]} : vector<8x64xf32> to vector<8x32xf32>
    %175 = vector.extract_strided_slice %173 {offsets = [0, 32], sizes = [8, 32], strides = [1, 1]} : vector<8x64xf32> to vector<8x32xf32>
    %176 = vector.extract_strided_slice %167 {offsets = [0, 64], sizes = [8, 32], strides = [1, 1]} : vector<8x128xf32> to vector<8x32xf32>
    %177 = vector.extract_strided_slice %167 {offsets = [0, 96], sizes = [8, 32], strides = [1, 1]} : vector<8x128xf32> to vector<8x32xf32>
    %178 = arith.mulf %174, %177 : vector<8x32xf32>
    %179 = arith.addf %176, %178 : vector<8x32xf32>
    %180 = math.tanh %179 : vector<8x32xf32>
    %cst_36 = arith.constant 1.000000e+00 : f32
    %181 = vector.broadcast %cst_36 : f32 to vector<8x32xf32>
    %182 = arith.subf %181, %175 : vector<8x32xf32>
    %183 = arith.mulf %182, %180 : vector<8x32xf32>
    %184 = arith.mulf %175, %154 : vector<8x32xf32>
    %185 = arith.addf %183, %184 : vector<8x32xf32>
    %186 = arith.truncf %185 : vector<8x32xf32> to vector<8x32xbf16>
    %cst_37 = arith.constant dense<0.000000e+00> : vector<8x128xf32>
    %187 = tpu.matmul %186, %1, %cst_37 {dimension_numbers = #tpu.dot_dimension_numbers<[1], [0], [0], [1], [0, 0, 1, 1], [], []>} : vector<8x32xbf16>, vector<32x128xbf16>, vector<8x128xf32> -> vector<8x128xf32>
    %188 = arith.addf %187, %2 : vector<8x128xf32>
    %cst_38 = arith.constant dense<0xFF800000> : vector<8xf32>
    %189 = vector.multi_reduction <maximumf>, %188, %cst_38 [1] : vector<8x128xf32> to vector<8xf32>
    %190 = vector.shape_cast %189 : vector<8xf32> to vector<8x1xf32>
    %191 = vector.broadcast %190 : vector<8x1xf32> to vector<8x128xf32>
    %192 = arith.cmpf oeq, %188, %191 : vector<8x128xf32>
    %193 = arith.extui %192 : vector<8x128xi1> to vector<8x128xi32>
    %194 = arith.sitofp %193 : vector<8x128xi32> to vector<8x128xf32>
    %195 = arith.truncf %194 : vector<8x128xf32> to vector<8x128xbf16>
    %196 = arith.truncf %185 : vector<8x32xf32> to vector<8x32xbf16>
    %197 = tpu.concatenate %195, %196 in 1 : vector<8x128xbf16>, vector<8x32xbf16> -> vector<8x160xbf16>
    %cst_39 = arith.constant dense<0.000000e+00> : vector<8x128xf32>
    %198 = tpu.matmul %197, %0, %cst_39 {dimension_numbers = #tpu.dot_dimension_numbers<[1], [0], [0], [1], [0, 0, 1, 1], [], []>} : vector<8x160xbf16>, vector<160x128xbf16>, vector<8x128xf32> -> vector<8x128xf32>
    %199 = vector.extract_strided_slice %198 {offsets = [0, 0], sizes = [8, 64], strides = [1, 1]} : vector<8x128xf32> to vector<8x64xf32>
    %200 = arith.negf %199 : vector<8x64xf32>
    %201 = math.exp %200 : vector<8x64xf32>
    %cst_40 = arith.constant 1.000000e+00 : f32
    %202 = vector.broadcast %cst_40 : f32 to vector<8x64xf32>
    %203 = arith.addf %202, %201 : vector<8x64xf32>
    %204 = arith.divf %202, %203 : vector<8x64xf32>
    %205 = vector.extract_strided_slice %204 {offsets = [0, 0], sizes = [8, 32], strides = [1, 1]} : vector<8x64xf32> to vector<8x32xf32>
    %206 = vector.extract_strided_slice %204 {offsets = [0, 32], sizes = [8, 32], strides = [1, 1]} : vector<8x64xf32> to vector<8x32xf32>
    %207 = vector.extract_strided_slice %198 {offsets = [0, 64], sizes = [8, 32], strides = [1, 1]} : vector<8x128xf32> to vector<8x32xf32>
    %208 = vector.extract_strided_slice %198 {offsets = [0, 96], sizes = [8, 32], strides = [1, 1]} : vector<8x128xf32> to vector<8x32xf32>
    %209 = arith.mulf %205, %208 : vector<8x32xf32>
    %210 = arith.addf %207, %209 : vector<8x32xf32>
    %211 = math.tanh %210 : vector<8x32xf32>
    %cst_41 = arith.constant 1.000000e+00 : f32
    %212 = vector.broadcast %cst_41 : f32 to vector<8x32xf32>
    %213 = arith.subf %212, %206 : vector<8x32xf32>
    %214 = arith.mulf %213, %211 : vector<8x32xf32>
    %215 = arith.mulf %206, %185 : vector<8x32xf32>
    %216 = arith.addf %214, %215 : vector<8x32xf32>
    %217 = arith.truncf %216 : vector<8x32xf32> to vector<8x32xbf16>
    %cst_42 = arith.constant dense<0.000000e+00> : vector<8x128xf32>
    %218 = tpu.matmul %217, %1, %cst_42 {dimension_numbers = #tpu.dot_dimension_numbers<[1], [0], [0], [1], [0, 0, 1, 1], [], []>} : vector<8x32xbf16>, vector<32x128xbf16>, vector<8x128xf32> -> vector<8x128xf32>
    %219 = arith.addf %218, %2 : vector<8x128xf32>
    %cst_43 = arith.constant dense<0xFF800000> : vector<8xf32>
    %220 = vector.multi_reduction <maximumf>, %219, %cst_43 [1] : vector<8x128xf32> to vector<8xf32>
    %221 = vector.shape_cast %220 : vector<8xf32> to vector<8x1xf32>
    %222 = vector.broadcast %221 : vector<8x1xf32> to vector<8x128xf32>
    %223 = arith.cmpf oeq, %219, %222 : vector<8x128xf32>
    %c0_44 = arith.constant 0 : index
    %c0_45 = arith.constant 0 : index
    %224 = vector.load %arg7[%c0_44, %c0_45] : memref<8x32xf32, #tpu.memory_space<vmem>>, vector<8x32xf32>
    tpu.vector_store %arg7[%c0_44, %c0_45], %216 {strides = array<i32>} : memref<8x32xf32, #tpu.memory_space<vmem>>, vector<8x32xf32>,
    %c7_i32 = arith.constant 7 : i32
    %225 = vector.broadcast %c7_i32 : i32 to vector<8xi32>
    %cst_46 = arith.constant dense<0xFF800000> : vector<8xf32>
    %226 = vector.multi_reduction <maximumf>, %31, %cst_46 [1] : vector<8x128xf32> to vector<8xf32>
    %227 = vector.shape_cast %226 : vector<8xf32> to vector<8x1xf32>
    %228 = vector.broadcast %227 : vector<8x1xf32> to vector<8x128xf32>
    %229 = arith.subf %31, %228 : vector<8x128xf32>
    %230 = vector.broadcast %227 : vector<8x1xf32> to vector<8x128xf32>
    %231 = arith.subf %31, %230 : vector<8x128xf32>
    %232 = math.exp %231 : vector<8x128xf32>
    %cst_47 = arith.constant dense<0.000000e+00> : vector<8xf32>
    %233 = vector.multi_reduction <add>, %232, %cst_47 [1] : vector<8x128xf32> to vector<8xf32>
    %234 = vector.shape_cast %233 : vector<8xf32> to vector<8x1xf32>
    %235 = math.log %234 : vector<8x1xf32>
    %236 = vector.broadcast %235 : vector<8x1xf32> to vector<8x128xf32>
    %237 = arith.subf %229, %236 : vector<8x128xf32>
    %238 = vector.shape_cast %237 : vector<8x128xf32> to vector<1x8x128xf32>
    %c0_48 = arith.constant 0 : index
    %c0_49 = arith.constant 0 : index
    %c0_50 = arith.constant 0 : index
    %239 = vector.load %arg5[%c0_48, %c0_49, %c0_50] : memref<7x8x128xf32, #tpu.memory_space<vmem>>, vector<1x8x128xf32>
    tpu.vector_store %arg5[%c0_48, %c0_49, %c0_50], %238 {strides = array<i32>} : memref<7x8x128xf32, #tpu.memory_space<vmem>>, vector<1x8x128xf32>,
    %c128_i32 = arith.constant 128 : i32
    %240 = vector.broadcast %c128_i32 : i32 to vector<8x128xi32>
    %241 = arith.select %37, %3, %240 : vector<8x128xi1>, vector<8x128xi32>
    %cst_51 = arith.constant dense<2147483647> : vector<8xi32>
    %242 = vector.multi_reduction <minsi>, %241, %cst_51 [1] : vector<8x128xi32> to vector<8xi32>
    %243 = vector.shape_cast %242 : vector<8xi32> to vector<1x8xi32>
    %c0_52 = arith.constant 0 : index
    %c0_53 = arith.constant 0 : index
    %244 = vector.load %arg6[%c0_52, %c0_53] : memref<7x8xi32, #tpu.memory_space<vmem>>, vector<1x8xi32>
    tpu.vector_store %arg6[%c0_52, %c0_53], %243 {strides = array<i32>} : memref<7x8xi32, #tpu.memory_space<vmem>>, vector<1x8xi32>,
    %c3_i32_54 = arith.constant 3 : i32
    %245 = vector.broadcast %c3_i32_54 : i32 to vector<8xi32>
    %246 = arith.cmpi eq, %242, %245 : vector<8xi32>
    %c1_i32 = arith.constant 1 : i32
    %c7_i32_55 = arith.constant 7 : i32
    %247 = vector.broadcast %c1_i32 : i32 to vector<8xi32>
    %248 = vector.broadcast %c7_i32_55 : i32 to vector<8xi32>
    %249 = arith.select %246, %247, %248 : vector<8xi1>, vector<8xi32>
    %250 = arith.minsi %225, %249 : vector<8xi32>
    %cst_56 = arith.constant dense<0xFF800000> : vector<8xf32>
    %251 = vector.multi_reduction <maximumf>, %64, %cst_56 [1] : vector<8x128xf32> to vector<8xf32>
    %252 = vector.shape_cast %251 : vector<8xf32> to vector<8x1xf32>
    %253 = vector.broadcast %252 : vector<8x1xf32> to vector<8x128xf32>
    %254 = arith.subf %64, %253 : vector<8x128xf32>
    %255 = vector.broadcast %252 : vector<8x1xf32> to vector<8x128xf32>
    %256 = arith.subf %64, %255 : vector<8x128xf32>
    %257 = math.exp %256 : vector<8x128xf32>
    %cst_57 = arith.constant dense<0.000000e+00> : vector<8xf32>
    %258 = vector.multi_reduction <add>, %257, %cst_57 [1] : vector<8x128xf32> to vector<8xf32>
    %259 = vector.shape_cast %258 : vector<8xf32> to vector<8x1xf32>
    %260 = math.log %259 : vector<8x1xf32>
    %261 = vector.broadcast %260 : vector<8x1xf32> to vector<8x128xf32>
    %262 = arith.subf %254, %261 : vector<8x128xf32>
    %263 = vector.shape_cast %262 : vector<8x128xf32> to vector<1x8x128xf32>
    %c1 = arith.constant 1 : index
    %c0_58 = arith.constant 0 : index
    %c0_59 = arith.constant 0 : index
    %264 = vector.load %arg5[%c1, %c0_58, %c0_59] : memref<7x8x128xf32, #tpu.memory_space<vmem>>, vector<1x8x128xf32>
    tpu.vector_store %arg5[%c1, %c0_58, %c0_59], %263 {strides = array<i32>} : memref<7x8x128xf32, #tpu.memory_space<vmem>>, vector<1x8x128xf32>,
    %c128_i32_60 = arith.constant 128 : i32
    %265 = vector.broadcast %c128_i32_60 : i32 to vector<8x128xi32>
    %266 = arith.select %68, %3, %265 : vector<8x128xi1>, vector<8x128xi32>
    %cst_61 = arith.constant dense<2147483647> : vector<8xi32>
    %267 = vector.multi_reduction <minsi>, %266, %cst_61 [1] : vector<8x128xi32> to vector<8xi32>
    %268 = vector.shape_cast %267 : vector<8xi32> to vector<1x8xi32>
    %c1_62 = arith.constant 1 : index
    %c0_63 = arith.constant 0 : index
    %269 = vector.load %arg6[%c1_62, %c0_63] : memref<7x8xi32, #tpu.memory_space<vmem>>, vector<1x8xi32>
    tpu.vector_store %arg6[%c1_62, %c0_63], %268 {strides = array<i32>} : memref<7x8xi32, #tpu.memory_space<vmem>>, vector<1x8xi32>,
    %c3_i32_64 = arith.constant 3 : i32
    %270 = vector.broadcast %c3_i32_64 : i32 to vector<8xi32>
    %271 = arith.cmpi eq, %267, %270 : vector<8xi32>
    %c2_i32 = arith.constant 2 : i32
    %c7_i32_65 = arith.constant 7 : i32
    %272 = vector.broadcast %c2_i32 : i32 to vector<8xi32>
    %273 = vector.broadcast %c7_i32_65 : i32 to vector<8xi32>
    %274 = arith.select %271, %272, %273 : vector<8xi1>, vector<8xi32>
    %275 = arith.minsi %250, %274 : vector<8xi32>
    %cst_66 = arith.constant dense<0xFF800000> : vector<8xf32>
    %276 = vector.multi_reduction <maximumf>, %95, %cst_66 [1] : vector<8x128xf32> to vector<8xf32>
    %277 = vector.shape_cast %276 : vector<8xf32> to vector<8x1xf32>
    %278 = vector.broadcast %277 : vector<8x1xf32> to vector<8x128xf32>
    %279 = arith.subf %95, %278 : vector<8x128xf32>
    %280 = vector.broadcast %277 : vector<8x1xf32> to vector<8x128xf32>
    %281 = arith.subf %95, %280 : vector<8x128xf32>
    %282 = math.exp %281 : vector<8x128xf32>
    %cst_67 = arith.constant dense<0.000000e+00> : vector<8xf32>
    %283 = vector.multi_reduction <add>, %282, %cst_67 [1] : vector<8x128xf32> to vector<8xf32>
    %284 = vector.shape_cast %283 : vector<8xf32> to vector<8x1xf32>
    %285 = math.log %284 : vector<8x1xf32>
    %286 = vector.broadcast %285 : vector<8x1xf32> to vector<8x128xf32>
    %287 = arith.subf %279, %286 : vector<8x128xf32>
    %288 = vector.shape_cast %287 : vector<8x128xf32> to vector<1x8x128xf32>
    %c2 = arith.constant 2 : index
    %c0_68 = arith.constant 0 : index
    %c0_69 = arith.constant 0 : index
    %289 = vector.load %arg5[%c2, %c0_68, %c0_69] : memref<7x8x128xf32, #tpu.memory_space<vmem>>, vector<1x8x128xf32>
    tpu.vector_store %arg5[%c2, %c0_68, %c0_69], %288 {strides = array<i32>} : memref<7x8x128xf32, #tpu.memory_space<vmem>>, vector<1x8x128xf32>,
    %c128_i32_70 = arith.constant 128 : i32
    %290 = vector.broadcast %c128_i32_70 : i32 to vector<8x128xi32>
    %291 = arith.select %99, %3, %290 : vector<8x128xi1>, vector<8x128xi32>
    %cst_71 = arith.constant dense<2147483647> : vector<8xi32>
    %292 = vector.multi_reduction <minsi>, %291, %cst_71 [1] : vector<8x128xi32> to vector<8xi32>
    %293 = vector.shape_cast %292 : vector<8xi32> to vector<1x8xi32>
    %c2_72 = arith.constant 2 : index
    %c0_73 = arith.constant 0 : index
    %294 = vector.load %arg6[%c2_72, %c0_73] : memref<7x8xi32, #tpu.memory_space<vmem>>, vector<1x8xi32>
    tpu.vector_store %arg6[%c2_72, %c0_73], %293 {strides = array<i32>} : memref<7x8xi32, #tpu.memory_space<vmem>>, vector<1x8xi32>,
    %c3_i32_74 = arith.constant 3 : i32
    %295 = vector.broadcast %c3_i32_74 : i32 to vector<8xi32>
    %296 = arith.cmpi eq, %292, %295 : vector<8xi32>
    %c3_i32_75 = arith.constant 3 : i32
    %c7_i32_76 = arith.constant 7 : i32
    %297 = vector.broadcast %c3_i32_75 : i32 to vector<8xi32>
    %298 = vector.broadcast %c7_i32_76 : i32 to vector<8xi32>
    %299 = arith.select %296, %297, %298 : vector<8xi1>, vector<8xi32>
    %300 = arith.minsi %275, %299 : vector<8xi32>
    %cst_77 = arith.constant dense<0xFF800000> : vector<8xf32>
    %301 = vector.multi_reduction <maximumf>, %126, %cst_77 [1] : vector<8x128xf32> to vector<8xf32>
    %302 = vector.shape_cast %301 : vector<8xf32> to vector<8x1xf32>
    %303 = vector.broadcast %302 : vector<8x1xf32> to vector<8x128xf32>
    %304 = arith.subf %126, %303 : vector<8x128xf32>
    %305 = vector.broadcast %302 : vector<8x1xf32> to vector<8x128xf32>
    %306 = arith.subf %126, %305 : vector<8x128xf32>
    %307 = math.exp %306 : vector<8x128xf32>
    %cst_78 = arith.constant dense<0.000000e+00> : vector<8xf32>
    %308 = vector.multi_reduction <add>, %307, %cst_78 [1] : vector<8x128xf32> to vector<8xf32>
    %309 = vector.shape_cast %308 : vector<8xf32> to vector<8x1xf32>
    %310 = math.log %309 : vector<8x1xf32>
    %311 = vector.broadcast %310 : vector<8x1xf32> to vector<8x128xf32>
    %312 = arith.subf %304, %311 : vector<8x128xf32>
    %313 = vector.shape_cast %312 : vector<8x128xf32> to vector<1x8x128xf32>
    %c3 = arith.constant 3 : index
    %c0_79 = arith.constant 0 : index
    %c0_80 = arith.constant 0 : index
    %314 = vector.load %arg5[%c3, %c0_79, %c0_80] : memref<7x8x128xf32, #tpu.memory_space<vmem>>, vector<1x8x128xf32>
    tpu.vector_store %arg5[%c3, %c0_79, %c0_80], %313 {strides = array<i32>} : memref<7x8x128xf32, #tpu.memory_space<vmem>>, vector<1x8x128xf32>,
    %c128_i32_81 = arith.constant 128 : i32
    %315 = vector.broadcast %c128_i32_81 : i32 to vector<8x128xi32>
    %316 = arith.select %130, %3, %315 : vector<8x128xi1>, vector<8x128xi32>
    %cst_82 = arith.constant dense<2147483647> : vector<8xi32>
    %317 = vector.multi_reduction <minsi>, %316, %cst_82 [1] : vector<8x128xi32> to vector<8xi32>
    %318 = vector.shape_cast %317 : vector<8xi32> to vector<1x8xi32>
    %c3_83 = arith.constant 3 : index
    %c0_84 = arith.constant 0 : index
    %319 = vector.load %arg6[%c3_83, %c0_84] : memref<7x8xi32, #tpu.memory_space<vmem>>, vector<1x8xi32>
    tpu.vector_store %arg6[%c3_83, %c0_84], %318 {strides = array<i32>} : memref<7x8xi32, #tpu.memory_space<vmem>>, vector<1x8xi32>,
    %c3_i32_85 = arith.constant 3 : i32
    %320 = vector.broadcast %c3_i32_85 : i32 to vector<8xi32>
    %321 = arith.cmpi eq, %317, %320 : vector<8xi32>
    %c4_i32 = arith.constant 4 : i32
    %c7_i32_86 = arith.constant 7 : i32
    %322 = vector.broadcast %c4_i32 : i32 to vector<8xi32>
    %323 = vector.broadcast %c7_i32_86 : i32 to vector<8xi32>
    %324 = arith.select %321, %322, %323 : vector<8xi1>, vector<8xi32>
    %325 = arith.minsi %300, %324 : vector<8xi32>
    %cst_87 = arith.constant dense<0xFF800000> : vector<8xf32>
    %326 = vector.multi_reduction <maximumf>, %157, %cst_87 [1] : vector<8x128xf32> to vector<8xf32>
    %327 = vector.shape_cast %326 : vector<8xf32> to vector<8x1xf32>
    %328 = vector.broadcast %327 : vector<8x1xf32> to vector<8x128xf32>
    %329 = arith.subf %157, %328 : vector<8x128xf32>
    %330 = vector.broadcast %327 : vector<8x1xf32> to vector<8x128xf32>
    %331 = arith.subf %157, %330 : vector<8x128xf32>
    %332 = math.exp %331 : vector<8x128xf32>
    %cst_88 = arith.constant dense<0.000000e+00> : vector<8xf32>
    %333 = vector.multi_reduction <add>, %332, %cst_88 [1] : vector<8x128xf32> to vector<8xf32>
    %334 = vector.shape_cast %333 : vector<8xf32> to vector<8x1xf32>
    %335 = math.log %334 : vector<8x1xf32>
    %336 = vector.broadcast %335 : vector<8x1xf32> to vector<8x128xf32>
    %337 = arith.subf %329, %336 : vector<8x128xf32>
    %338 = vector.shape_cast %337 : vector<8x128xf32> to vector<1x8x128xf32>
    %c4 = arith.constant 4 : index
    %c0_89 = arith.constant 0 : index
    %c0_90 = arith.constant 0 : index
    %339 = vector.load %arg5[%c4, %c0_89, %c0_90] : memref<7x8x128xf32, #tpu.memory_space<vmem>>, vector<1x8x128xf32>
    tpu.vector_store %arg5[%c4, %c0_89, %c0_90], %338 {strides = array<i32>} : memref<7x8x128xf32, #tpu.memory_space<vmem>>, vector<1x8x128xf32>,
    %c128_i32_91 = arith.constant 128 : i32
    %340 = vector.broadcast %c128_i32_91 : i32 to vector<8x128xi32>
    %341 = arith.select %161, %3, %340 : vector<8x128xi1>, vector<8x128xi32>
    %cst_92 = arith.constant dense<2147483647> : vector<8xi32>
    %342 = vector.multi_reduction <minsi>, %341, %cst_92 [1] : vector<8x128xi32> to vector<8xi32>
    %343 = vector.shape_cast %342 : vector<8xi32> to vector<1x8xi32>
    %c4_93 = arith.constant 4 : index
    %c0_94 = arith.constant 0 : index
    %344 = vector.load %arg6[%c4_93, %c0_94] : memref<7x8xi32, #tpu.memory_space<vmem>>, vector<1x8xi32>
    tpu.vector_store %arg6[%c4_93, %c0_94], %343 {strides = array<i32>} : memref<7x8xi32, #tpu.memory_space<vmem>>, vector<1x8xi32>,
    %c3_i32_95 = arith.constant 3 : i32
    %345 = vector.broadcast %c3_i32_95 : i32 to vector<8xi32>
    %346 = arith.cmpi eq, %342, %345 : vector<8xi32>
    %c5_i32 = arith.constant 5 : i32
    %c7_i32_96 = arith.constant 7 : i32
    %347 = vector.broadcast %c5_i32 : i32 to vector<8xi32>
    %348 = vector.broadcast %c7_i32_96 : i32 to vector<8xi32>
    %349 = arith.select %346, %347, %348 : vector<8xi1>, vector<8xi32>
    %350 = arith.minsi %325, %349 : vector<8xi32>
    %cst_97 = arith.constant dense<0xFF800000> : vector<8xf32>
    %351 = vector.multi_reduction <maximumf>, %188, %cst_97 [1] : vector<8x128xf32> to vector<8xf32>
    %352 = vector.shape_cast %351 : vector<8xf32> to vector<8x1xf32>
    %353 = vector.broadcast %352 : vector<8x1xf32> to vector<8x128xf32>
    %354 = arith.subf %188, %353 : vector<8x128xf32>
    %355 = vector.broadcast %352 : vector<8x1xf32> to vector<8x128xf32>
    %356 = arith.subf %188, %355 : vector<8x128xf32>
    %357 = math.exp %356 : vector<8x128xf32>
    %cst_98 = arith.constant dense<0.000000e+00> : vector<8xf32>
    %358 = vector.multi_reduction <add>, %357, %cst_98 [1] : vector<8x128xf32> to vector<8xf32>
    %359 = vector.shape_cast %358 : vector<8xf32> to vector<8x1xf32>
    %360 = math.log %359 : vector<8x1xf32>
    %361 = vector.broadcast %360 : vector<8x1xf32> to vector<8x128xf32>
    %362 = arith.subf %354, %361 : vector<8x128xf32>
    %363 = vector.shape_cast %362 : vector<8x128xf32> to vector<1x8x128xf32>
    %c5 = arith.constant 5 : index
    %c0_99 = arith.constant 0 : index
    %c0_100 = arith.constant 0 : index
    %364 = vector.load %arg5[%c5, %c0_99, %c0_100] : memref<7x8x128xf32, #tpu.memory_space<vmem>>, vector<1x8x128xf32>
    tpu.vector_store %arg5[%c5, %c0_99, %c0_100], %363 {strides = array<i32>} : memref<7x8x128xf32, #tpu.memory_space<vmem>>, vector<1x8x128xf32>,
    %c128_i32_101 = arith.constant 128 : i32
    %365 = vector.broadcast %c128_i32_101 : i32 to vector<8x128xi32>
    %366 = arith.select %192, %3, %365 : vector<8x128xi1>, vector<8x128xi32>
    %cst_102 = arith.constant dense<2147483647> : vector<8xi32>
    %367 = vector.multi_reduction <minsi>, %366, %cst_102 [1] : vector<8x128xi32> to vector<8xi32>
    %368 = vector.shape_cast %367 : vector<8xi32> to vector<1x8xi32>
    %c5_103 = arith.constant 5 : index
    %c0_104 = arith.constant 0 : index
    %369 = vector.load %arg6[%c5_103, %c0_104] : memref<7x8xi32, #tpu.memory_space<vmem>>, vector<1x8xi32>
    tpu.vector_store %arg6[%c5_103, %c0_104], %368 {strides = array<i32>} : memref<7x8xi32, #tpu.memory_space<vmem>>, vector<1x8xi32>,
    %c3_i32_105 = arith.constant 3 : i32
    %370 = vector.broadcast %c3_i32_105 : i32 to vector<8xi32>
    %371 = arith.cmpi eq, %367, %370 : vector<8xi32>
    %c6_i32 = arith.constant 6 : i32
    %c7_i32_106 = arith.constant 7 : i32
    %372 = vector.broadcast %c6_i32 : i32 to vector<8xi32>
    %373 = vector.broadcast %c7_i32_106 : i32 to vector<8xi32>
    %374 = arith.select %371, %372, %373 : vector<8xi1>, vector<8xi32>
    %375 = arith.minsi %350, %374 : vector<8xi32>
    %cst_107 = arith.constant dense<0xFF800000> : vector<8xf32>
    %376 = vector.multi_reduction <maximumf>, %219, %cst_107 [1] : vector<8x128xf32> to vector<8xf32>
    %377 = vector.shape_cast %376 : vector<8xf32> to vector<8x1xf32>
    %378 = vector.broadcast %377 : vector<8x1xf32> to vector<8x128xf32>
    %379 = arith.subf %219, %378 : vector<8x128xf32>
    %380 = vector.broadcast %377 : vector<8x1xf32> to vector<8x128xf32>
    %381 = arith.subf %219, %380 : vector<8x128xf32>
    %382 = math.exp %381 : vector<8x128xf32>
    %cst_108 = arith.constant dense<0.000000e+00> : vector<8xf32>
    %383 = vector.multi_reduction <add>, %382, %cst_108 [1] : vector<8x128xf32> to vector<8xf32>
    %384 = vector.shape_cast %383 : vector<8xf32> to vector<8x1xf32>
    %385 = math.log %384 : vector<8x1xf32>
    %386 = vector.broadcast %385 : vector<8x1xf32> to vector<8x128xf32>
    %387 = arith.subf %379, %386 : vector<8x128xf32>
    %388 = vector.shape_cast %387 : vector<8x128xf32> to vector<1x8x128xf32>
    %c6 = arith.constant 6 : index
    %c0_109 = arith.constant 0 : index
    %c0_110 = arith.constant 0 : index
    %389 = vector.load %arg5[%c6, %c0_109, %c0_110] : memref<7x8x128xf32, #tpu.memory_space<vmem>>, vector<1x8x128xf32>
    tpu.vector_store %arg5[%c6, %c0_109, %c0_110], %388 {strides = array<i32>} : memref<7x8x128xf32, #tpu.memory_space<vmem>>, vector<1x8x128xf32>,
    %c128_i32_111 = arith.constant 128 : i32
    %390 = vector.broadcast %c128_i32_111 : i32 to vector<8x128xi32>
    %391 = arith.select %223, %3, %390 : vector<8x128xi1>, vector<8x128xi32>
    %cst_112 = arith.constant dense<2147483647> : vector<8xi32>
    %392 = vector.multi_reduction <minsi>, %391, %cst_112 [1] : vector<8x128xi32> to vector<8xi32>
    %393 = vector.shape_cast %392 : vector<8xi32> to vector<1x8xi32>
    %c6_113 = arith.constant 6 : index
    %c0_114 = arith.constant 0 : index
    %394 = vector.load %arg6[%c6_113, %c0_114] : memref<7x8xi32, #tpu.memory_space<vmem>>, vector<1x8xi32>
    tpu.vector_store %arg6[%c6_113, %c0_114], %393 {strides = array<i32>} : memref<7x8xi32, #tpu.memory_space<vmem>>, vector<1x8xi32>,
    %c3_i32_115 = arith.constant 3 : i32
    %395 = vector.broadcast %c3_i32_115 : i32 to vector<8xi32>
    %396 = arith.cmpi eq, %392, %395 : vector<8xi32>
    %c7_i32_116 = arith.constant 7 : i32
    %c7_i32_117 = arith.constant 7 : i32
    %397 = vector.broadcast %c7_i32_116 : i32 to vector<8xi32>
    %398 = vector.broadcast %c7_i32_117 : i32 to vector<8xi32>
    %399 = arith.select %396, %397, %398 : vector<8xi1>, vector<8xi32>
    %400 = arith.minsi %375, %399 : vector<8xi32>
    %401 = vector.shape_cast %400 : vector<8xi32> to vector<1x8xi32>
    %c0_118 = arith.constant 0 : index
    %c0_119 = arith.constant 0 : index
    %402 = vector.load %arg8[%c0_118, %c0_119] : memref<1x8xi32, #tpu.memory_space<vmem>>, vector<1x8xi32>
    tpu.vector_store %arg8[%c0_118, %c0_119], %401 {strides = array<i32>} : memref<1x8xi32, #tpu.memory_space<vmem>>, vector<1x8xi32>,
    return
  }
}

</mosaic_0001>

<llo_original>
// kernel: tpu_custom_call.1
$region0: #{tpu_custom_call.1}
  #allocation0 [shape = 'u32[]', space=smem, size = 0x4, offset = 0x4, fixed_abs, tag = 'smem constant byte address 0x4 - core index']
  #allocation1 [shape = 'u32[144,128]{1,0:T(1,128)}', space=vmem, size = 0x12000, scoped, tag = 'internal scratch']
  %s0 = inlined_call_operand.hbm [shape: bf16[160,128], index: 0, kind: input, shape index: {}]
  %s1 = inlined_call_operand.hbm [shape: bf16[32,128], index: 1, kind: input, shape index: {}]
  %s2 = inlined_call_operand.hbm [shape: f32[8,128], index: 2, kind: input, shape index: {}]
  %s3 = inlined_call_operand.hbm [shape: f32[8,32], index: 3, kind: input, shape index: {}]
  %s4 = inlined_call_operand.vmem [shape: bf16[8,128], index: 4, kind: input, shape index: {}]
  %s5 = inlined_call_operand.hbm [shape: f32[7,8,128], index: 5, kind: output, shape index: {0}]
  %s6 = inlined_call_operand.hbm [shape: s32[7,8], index: 6, kind: output, shape index: {1}]
  %s7 = inlined_call_operand.hbm [shape: f32[8,32], index: 7, kind: output, shape index: {2}]
  %s8 = inlined_call_operand.hbm [shape: s32[1,8], index: 8, kind: output, shape index: {3}]
  %9 = xla_tuple %s5, %s6, %s7, %s8
  %s10 = sld [smem:[#allocation0]]
  $region70: #{tpu_custom_call.1} parent=0
    _
  %s12 = ssub.s32 1, %s10
  %s13 = scalar_select 0, %s12, %s10
  $region1: #{tpu_custom_call.1} parent=0
    #allocation2 [shape = 'u8[40960]{0}', space=vmem, size = 0xa000, scoped, tag = 'input window, operand 0, single buffered']
    #allocation3 [shape = 's32[1]{0}', space=sflag, size = 0x4, scoped, tag = 'scoped memory for tpu_custom_call.1']
    #allocation4 [shape = 's32[1]{0}', space=sflag, size = 0x4, scoped, tag = 'scoped memory for tpu_custom_call.1']
    #allocation5 [shape = 'u8[8192]{0}', space=vmem, size = 0x2000, scoped, tag = 'input window, operand 1, single buffered']
    #allocation6 [shape = 's32[1]{0}', space=sflag, size = 0x4, scoped, tag = 'scoped memory for tpu_custom_call.1']
    #allocation7 [shape = 'u8[4096]{0}', space=vmem, size = 0x1000, scoped, tag = 'input window, operand 2, single buffered']
    #allocation8 [shape = 'u8[4096]{0}', space=vmem, size = 0x1000, scoped, tag = 'input window, operand 3, single buffered']
    #allocation9 [shape = 's32[1]{0}', space=sflag, size = 0x4, scoped, tag = 'scoped memory for tpu_custom_call.1']
    #allocation10 [shape = 'u8[28672]{0}', space=vmem, size = 0x7000, scoped, tag = 'output window, operand 0, single buffered']
    #allocation11 [shape = 'u8[4096]{0}', space=vmem, size = 0x1000, scoped, tag = 'output window, operand 1, single buffered']
    #allocation12 [shape = 's32[1]{0}', space=sflag, size = 0x4, scoped, tag = 'scoped memory for tpu_custom_call.1']
    #allocation13 [shape = 'u8[4096]{0}', space=vmem, size = 0x1000, scoped, tag = 'output window, operand 2, single buffered']
    #allocation14 [shape = 'u8[512]{0}', space=vmem, size = 0x400, scoped, tag = 'output window, operand 3, single buffered']
    #allocation15 [shape = 's32[1]{0}', space=sflag, size = 0x4, scoped, tag = 'scoped memory for tpu_custom_call.1']
    %14 = vsyncpa [#allocation3], 0
    %15 = vsyncpa [#allocation6], 0
    %16 = vsyncpa [#allocation9], 0
    %17 = vsyncpa [#allocation4], 0
    %18 = vsyncpa [#allocation12], 0
    %19 = vsyncpa [#allocation15], 0
    // Predicated region
    $region2: #{tpu_custom_call.1} parent=1 // pred_check
      _
    $region3: #{tpu_custom_call.1} parent=1 // pred_check_branch
      %21 = sbr.rel (0) target = $region5
    $region4: #{tpu_custom_call.1} parent=1 // pred_region
      %s23 = ssub.s32 1280, 1280
      %24 = vsyncadd [#allocation3], %s23
      %s25 = sshll.u32 [#allocation2], 4
      %s26 = int_to_ptr.vmem [resolvable:$true] %s25
      %31 = dma.hbm_to_vmem [thread:$0]  %s0, 1280, %s26, [#allocation3], 64, 64, 4
    $region5: #{tpu_custom_call.1} parent=1 // pred_fallthru
      _
    // Predicated region
    $region6: #{tpu_custom_call.1} parent=1 // pred_check
      _
    $region7: #{tpu_custom_call.1} parent=1 // pred_check_branch
      %33 = sbr.rel (0) target = $region9
    $region8: #{tpu_custom_call.1} parent=1 // pred_region
      %s35 = ssub.s32 256, 256
      %36 = vsyncadd [#allocation6], %s35
      %s37 = sshll.u32 [#allocation5], 4
      %s38 = int_to_ptr.vmem [resolvable:$true] %s37
      %43 = dma.hbm_to_vmem [thread:$0]  %s1, 256, %s38, [#allocation6], 64, 64, 4
    $region9: #{tpu_custom_call.1} parent=1 // pred_fallthru
      _
    // Predicated region
    $region10: #{tpu_custom_call.1} parent=1 // pred_check
      _
    $region11: #{tpu_custom_call.1} parent=1 // pred_check_branch
      %45 = sbr.rel (0) target = $region13
    $region12: #{tpu_custom_call.1} parent=1 // pred_region
      %s47 = ssub.s32 128, 128
      %48 = vsyncadd [#allocation6], %s47
      %s50 = sshll.u32 [#allocation7], 4
      %s51 = int_to_ptr.vmem [resolvable:$true] %s50
      %53 = dma.hbm_to_vmem [thread:$0]  %s2, 128, %s51, [#allocation6]
    $region13: #{tpu_custom_call.1} parent=1 // pred_fallthru
      _
    // Predicated region
    $region14: #{tpu_custom_call.1} parent=1 // pred_check
      _
    $region15: #{tpu_custom_call.1} parent=1 // pred_check_branch
      %55 = sbr.rel (0) target = $region17
    $region16: #{tpu_custom_call.1} parent=1 // pred_region
      %s57 = ssub.s32 128, 128
      %58 = vsyncadd [#allocation9], %s57
      %s60 = sshll.u32 [#allocation8], 4
      %s61 = int_to_ptr.vmem [resolvable:$true] %s60
      %63 = dma.hbm_to_vmem [thread:$0]  %s3, 128, %s61, [#allocation9]
    $region17: #{tpu_custom_call.1} parent=1 // pred_fallthru
      _
    // Predicated region
    $region18: #{tpu_custom_call.1} parent=1 // pred_check
      _
    $region19: #{tpu_custom_call.1} parent=1 // pred_check_branch
      %65 = sbr.rel (0) target = $region21
    $region20: #{tpu_custom_call.1} parent=1 // pred_region
      _
    $region21: #{tpu_custom_call.1} parent=1 // pred_fallthru
      _
    // Predicated region
    $region22: #{tpu_custom_call.1} parent=1 // pred_check
      _
    $region23: #{tpu_custom_call.1} parent=1 // pred_check_branch
      %67 = sbr.rel (0) target = $region25
    $region24: #{tpu_custom_call.1} parent=1 // pred_region
      %68 = dma.done [#allocation3], 1280
    $region25: #{tpu_custom_call.1} parent=1 // pred_fallthru
      _
    // Predicated region
    $region26: #{tpu_custom_call.1} parent=1 // pred_check
      _
    $region27: #{tpu_custom_call.1} parent=1 // pred_check_branch
      %70 = sbr.rel (0) target = $region29
    $region28: #{tpu_custom_call.1} parent=1 // pred_region
      %71 = dma.done [#allocation6], 256
    $region29: #{tpu_custom_call.1} parent=1 // pred_fallthru
      _
    // Predicated region
    $region30: #{tpu_custom_call.1} parent=1 // pred_check
      _
    $region31: #{tpu_custom_call.1} parent=1 // pred_check_branch
      %73 = sbr.rel (0) target = $region33
    $region32: #{tpu_custom_call.1} parent=1 // pred_region
      %74 = dma.done [#allocation6], 128
    $region33: #{tpu_custom_call.1} parent=1 // pred_fallthru
      _
    // Predicated region
    $region34: #{tpu_custom_call.1} parent=1 // pred_check
      _
    $region35: #{tpu_custom_call.1} parent=1 // pred_check_branch
      %76 = sbr.rel (0) target = $region37
    $region36: #{tpu_custom_call.1} parent=1 // pred_region
      %77 = dma.done [#allocation9], 128
    $region37: #{tpu_custom_call.1} parent=1 // pred_fallthru
      _
    %v79 = vld [vmem:[#allocation2] sm:$0xf]
    %v80 = vld [vmem:[#allocation2 + $0x4] sm:$0xf]
    %v81 = vld [vmem:[#allocation2 + $0x8] sm:$0xf]
    %v82 = vld [vmem:[#allocation2 + $0xc] sm:$0xf]
    %v83 = vld [vmem:[#allocation2 + $0x10] sm:$0xf]
    %v84 = vld [vmem:[#allocation2 + $0x14] sm:$0xf]
    %v85 = vld [vmem:[#allocation2 + $0x18] sm:$0xf]
    %v86 = vld [vmem:[#allocation2 + $0x1c] sm:$0xf]
    %v87 = vld [vmem:[#allocation2 + $0x20] sm:$0xf]
    %v88 = vld [vmem:[#allocation2 + $0x24] sm:$0xf]
    %v89 = vld [vmem:[#allocation2 + $0x28] sm:$0xf]
    %v90 = vld [vmem:[#allocation2 + $0x2c] sm:$0xf]
    %v91 = vld [vmem:[#allocation2 + $0x30] sm:$0xf]
    %v92 = vld [vmem:[#allocation2 + $0x34] sm:$0xf]
    %v93 = vld [vmem:[#allocation2 + $0x38] sm:$0xf]
    %v94 = vld [vmem:[#allocation2 + $0x3c] sm:$0xf]
    %v95 = vld [vmem:[#allocation2 + $0x40] sm:$0xf]
    %v96 = vld [vmem:[#allocation2 + $0x44] sm:$0xf]
    %v97 = vld [vmem:[#allocation2 + $0x48] sm:$0xf]
    %v98 = vld [vmem:[#allocation2 + $0x4c] sm:$0xf]
    %v99 = vld [vmem:[#allocation5] sm:$0xf]
    %v100 = vld [vmem:[#allocation5 + $0x4] sm:$0xf]
    %v101 = vld [vmem:[#allocation5 + $0x8] sm:$0xf]
    %v102 = vld [vmem:[#allocation5 + $0xc] sm:$0xf]
    %v103 = vld [vmem:[#allocation7] sm:$0xff]
    %v104 = vlaneseq
    %v105 = vand.u32 %v104, 127
    %vm106 = vcmp.eq.s32.totalorder %v105, 3
    %v107 = vld [vmem:[#allocation8] sm:$0xff]
    %v108 = vld [vmem:[%s4] sm:$0xf]
    %v109 = vpack.c.bf16 %v107, %v107
    %v130 = vunpack.c.l.b16 %v79
    %v131 = vunpack.c.l.b16 %v80
    %v132 = vunpack.c.l.b16 %v81
    %v133 = vunpack.c.l.b16 %v82
    %v134 = vunpack.c.l.b16 %v83
    %v135 = vunpack.c.l.b16 %v84
    %v136 = vunpack.c.l.b16 %v85
    %v137 = vunpack.c.l.b16 %v86
    %v138 = vunpack.c.l.b16 %v87
    %v139 = vunpack.c.l.b16 %v88
    %v140 = vunpack.c.l.b16 %v89
    %v141 = vunpack.c.l.b16 %v90
    %v142 = vunpack.c.l.b16 %v91
    %v143 = vunpack.c.l.b16 %v92
    %v144 = vunpack.c.l.b16 %v93
    %v145 = vunpack.c.l.b16 %v94
    %v146 = vunpack.c.l.b16 %v95
    %v147 = vunpack.c.l.b16 %v96
    %v148 = vunpack.c.l.b16 %v97
    %v149 = vunpack.c.l.b16 %v98
    %v150 = vpack.c.b16 %v131, %v130
    %v151 = vpack.c.b16 %v133, %v132
    %v152 = vpack.c.b16 %v135, %v134
    %v153 = vpack.c.b16 %v137, %v136
    %v154 = vpack.c.b16 %v139, %v138
    %v155 = vpack.c.b16 %v141, %v140
    %v156 = vpack.c.b16 %v143, %v142
    %v157 = vpack.c.b16 %v145, %v144
    %v158 = vpack.c.b16 %v147, %v146
    %v159 = vpack.c.b16 %v149, %v148
    %vm170 = vcmask 261120
    %v172 = vsel %vm170, %v109, 0
    %174 = vmatprep.subr.bf16.mxu0 0
    %175 = vmatpush1.bf16.msra.mxu0 %v157
    %176 = vmatprep.subr.bf16.mxu0 0
    %177 = vmatpush1.bf16.msra.mxu0 %v156
    %178 = vmatprep.subr.bf16.mxu0 0
    %179 = vmatpush1.bf16.msra.mxu0 %v155
    %180 = vmatprep.subr.bf16.mxu0 0
    %181 = vmatpush1.bf16.msra.mxu0 %v154
    %182 = vmatprep.subr.bf16.mxu0 0
    %183 = vmatpush1.bf16.msra.mxu0 %v153
    %184 = vmatprep.subr.bf16.mxu0 0
    %185 = vmatpush1.bf16.msra.mxu0 %v152
    %186 = vmatprep.subr.bf16.mxu0 0
    %187 = vmatpush1.bf16.msra.mxu0 %v151
    %188 = vmatprep.subr.bf16.mxu0 0
    %189 = vmatpush1.bf16.msra.mxu0 %v150
    %190 = vmatprep.subr.bf16.mxu0 0
    %191 = vmatpush2.bf16.msra.mxu0 0
    %192 = vmatprep.subr.bf16.mxu0 0
    %193 = vmatpush2.bf16.msra.mxu0 0
    %194 = vmatprep.subr.bf16.mxu0 0
    %195 = vmatpush2.bf16.msra.mxu0 0
    %196 = vmatprep.subr.bf16.mxu0 0
    %197 = vmatpush2.bf16.msra.mxu0 0
    %198 = vmatprep.subr.bf16.mxu0 0
    %199 = vmatpush2.bf16.msra.mxu0 0
    %200 = vmatprep.subr.bf16.mxu0 0
    %201 = vmatpush2.bf16.msra.mxu0 0
    %202 = vmatprep.subr.bf16.mxu0 0
    %203 = vmatpush2.bf16.msra.mxu0 %v159
    %204 = vmatprep.subr.bf16.mxu0 0
    %205 = vmatpush2.bf16.msra.mxu0 %v158
    %206 = vmatprep.mubr.bf16.mxu0 %v172
    %207 = vmatmul.mubr.bf16.gmra.mxu0 %v108
    %v208 = vpop.f32.mrf.mxu0
    %v209 = vadd.f32 0.0, %v208
    %v210 = vpop.f32.mrf.mxu0
    %v211 = vpop.f32.mrf.mxu0
    %v212 = vpop.f32.mrf.mxu0
    %213 = vdwg.mxu0
    %v214 = vxor.u32 %v209, 2147483648
    %v215 = vmul.f32 %v214, 1.442695
    %v216 = vpow.pop %v215
    %v217 = vadd.f32 %v216, 1.0
    %v218 = vrcp.pop %v217
    %v219 = vmul.f32 1.0, %v218
    %221 = vrot.lane.b32.xlu0 %v209, 32
    %v222 = vpop.permute.xlu0 %221
    %v224 = vmul.f32 %v219, %v222
    %226 = vrot.lane.b32.xlu0 %v224, 64
    %v227 = vpop.permute.xlu0 %226
    %v229 = vadd.f32 %v209, %v227
    %v230 = vtanh.pop %v229
    %v231 = vsub.f32 1.0, %v219
    %233 = vrot.lane.b32.xlu0 %v230, 96
    %v234 = vpop.permute.xlu0 %233
    %v236 = vmul.f32 %v231, %v234
    %238 = vrot.lane.b32.xlu0 %v107, 32
    %v239 = vpop.permute.xlu0 %238
    %v241 = vmul.f32 %v219, %v239
    %v242 = vadd.f32 %v236, %v241
    %v243 = vpack.c.bf16 %v242, %v242
    %245 = vrot.lane.b32.xlu0 %v243, 96
    %v246 = vpop.permute.xlu0 %245
    %v251 = vunpack.c.l.b16 %v99
    %v252 = vunpack.c.l.b16 %v100
    %v253 = vunpack.c.l.b16 %v101
    %v254 = vunpack.c.l.b16 %v102
    %v255 = vpack.c.b16 %v252, %v251
    %v256 = vpack.c.b16 %v254, %v253
    %v260 = vsel %vm170, %v246, 0
    %262 = vmatprep.subr.bf16.mxu0 0
    %263 = vmatpush1.bf16.msra.mxu0 0
    %264 = vmatprep.subr.bf16.mxu0 0
    %265 = vmatpush1.bf16.msra.mxu0 0
    %266 = vmatprep.subr.bf16.mxu0 0
    %267 = vmatpush1.bf16.msra.mxu0 0
    %268 = vmatprep.subr.bf16.mxu0 0
    %269 = vmatpush1.bf16.msra.mxu0 0
    %270 = vmatprep.subr.bf16.mxu0 0
    %271 = vmatpush1.bf16.msra.mxu0 0
    %272 = vmatprep.subr.bf16.mxu0 0
    %273 = vmatpush1.bf16.msra.mxu0 0
    %274 = vmatprep.subr.bf16.mxu0 0
    %275 = vmatpush1.bf16.msra.mxu0 %v256
    %276 = vmatprep.subr.bf16.mxu0 0
    %277 = vmatpush1.bf16.msra.mxu0 %v255
    %278 = vmatprep.subr.bf16.mxu0 0
    %279 = vmatpush2.bf16.msra.mxu0 0
    %280 = vmatprep.subr.bf16.mxu0 0
    %281 = vmatpush2.bf16.msra.mxu0 0
    %282 = vmatprep.subr.bf16.mxu0 0
    %283 = vmatpush2.bf16.msra.mxu0 0
    %284 = vmatprep.subr.bf16.mxu0 0
    %285 = vmatpush2.bf16.msra.mxu0 0
    %286 = vmatprep.subr.bf16.mxu0 0
    %287 = vmatpush2.bf16.msra.mxu0 0
    %288 = vmatprep.subr.bf16.mxu0 0
    %289 = vmatpush2.bf16.msra.mxu0 0
    %290 = vmatprep.subr.bf16.mxu0 0
    %291 = vmatpush2.bf16.msra.mxu0 0
    %292 = vmatprep.subr.bf16.mxu0 0
    %293 = vmatpush2.bf16.msra.mxu0 0
    %294 = vmatprep.mubr.bf16.mxu0 0
    %295 = vmatmul.mubr.bf16.gmra.mxu0 %v260
    %v296 = vpop.f32.mrf.mxu0
    %v297 = vadd.f32 %v103, %v296
    %v298 = vpop.f32.mrf.mxu0
    %v299 = vpop.f32.mrf.mxu0
    %v300 = vpop.f32.mrf.mxu0
    %301 = vdwg.mxu0
    %v302 = vsel %vm106, -1e+30, %v297
    %303 = vmax.xlane.f32.xlu0 %v302
    %v304 = vpop.xlane.xlu0 %303
    %vm305 = vcmp.eq.f32.partialorder %v302, %v304
    %v306 = vsel %vm305, 1, 0
    %v307 = vcvt.s32.f32 %v306
    %v308 = vpack.c.bf16 %v307, %v307
    %309 = vmatprep.subr.bf16.mxu0 0
    %310 = vmatpush1.bf16.msra.mxu0 %v157
    %311 = vmatprep.subr.bf16.mxu0 0
    %312 = vmatpush1.bf16.msra.mxu0 %v156
    %313 = vmatprep.subr.bf16.mxu0 0
    %314 = vmatpush1.bf16.msra.mxu0 %v155
    %315 = vmatprep.subr.bf16.mxu0 0
    %316 = vmatpush1.bf16.msra.mxu0 %v154
    %317 = vmatprep.subr.bf16.mxu0 0
    %318 = vmatpush1.bf16.msra.mxu0 %v153
    %319 = vmatprep.subr.bf16.mxu0 0
    %320 = vmatpush1.bf16.msra.mxu0 %v152
    %321 = vmatprep.subr.bf16.mxu0 0
    %322 = vmatpush1.bf16.msra.mxu0 %v151
    %323 = vmatprep.subr.bf16.mxu0 0
    %324 = vmatpush1.bf16.msra.mxu0 %v150
    %325 = vmatprep.subr.bf16.mxu0 0
    %326 = vmatpush2.bf16.msra.mxu0 0
    %327 = vmatprep.subr.bf16.mxu0 0
    %328 = vmatpush2.bf16.msra.mxu0 0
    %329 = vmatprep.subr.bf16.mxu0 0
    %330 = vmatpush2.bf16.msra.mxu0 0
    %331 = vmatprep.subr.bf16.mxu0 0
    %332 = vmatpush2.bf16.msra.mxu0 0
    %333 = vmatprep.subr.bf16.mxu0 0
    %334 = vmatpush2.bf16.msra.mxu0 0
    %335 = vmatprep.subr.bf16.mxu0 0
    %336 = vmatpush2.bf16.msra.mxu0 0
    %337 = vmatprep.subr.bf16.mxu0 0
    %338 = vmatpush2.bf16.msra.mxu0 %v159
    %339 = vmatprep.subr.bf16.mxu0 0
    %340 = vmatpush2.bf16.msra.mxu0 %v158
    %341 = vmatprep.mubr.bf16.mxu0 %v260
    %342 = vmatmul.mubr.bf16.gmra.mxu0 %v308
    %v343 = vpop.f32.mrf.mxu0
    %v344 = vadd.f32 0.0, %v343
    %v345 = vpop.f32.mrf.mxu0
    %v346 = vpop.f32.mrf.mxu0
    %v347 = vpop.f32.mrf.mxu0
    %348 = vdwg.mxu0
    %v349 = vxor.u32 %v344, 2147483648
    %v350 = vmul.f32 %v349, 1.442695
    %v351 = vpow.pop %v350
    %v352 = vadd.f32 %v351, 1.0
    %v353 = vrcp.pop %v352
    %v354 = vmul.f32 1.0, %v353
    %356 = vrot.lane.b32.xlu0 %v344, 32
    %v357 = vpop.permute.xlu0 %356
    %v359 = vmul.f32 %v354, %v357
    %361 = vrot.lane.b32.xlu0 %v359, 64
    %v362 = vpop.permute.xlu0 %361
    %v364 = vadd.f32 %v344, %v362
    %v365 = vtanh.pop %v364
    %v366 = vsub.f32 1.0, %v354
    %368 = vrot.lane.b32.xlu0 %v365, 96
    %v369 = vpop.permute.xlu0 %368
    %v371 = vmul.f32 %v366, %v369
    %v372 = vmul.f32 %v354, %v242
    %v373 = vadd.f32 %v371, %v372
    %v374 = vpack.c.bf16 %v373, %v373
    %376 = vrot.lane.b32.xlu0 %v374, 96
    %v377 = vpop.permute.xlu0 %376
    %v379 = vsel %vm170, %v377, 0
    %381 = vmatprep.subr.bf16.mxu0 0
    %382 = vmatpush1.bf16.msra.mxu0 0
    %383 = vmatprep.subr.bf16.mxu0 0
    %384 = vmatpush1.bf16.msra.mxu0 0
    %385 = vmatprep.subr.bf16.mxu0 0
    %386 = vmatpush1.bf16.msra.mxu0 0
    %387 = vmatprep.subr.bf16.mxu0 0
    %388 = vmatpush1.bf16.msra.mxu0 0
    %389 = vmatprep.subr.bf16.mxu0 0
    %390 = vmatpush1.bf16.msra.mxu0 0
    %391 = vmatprep.subr.bf16.mxu0 0
    %392 = vmatpush1.bf16.msra.mxu0 0
    %393 = vmatprep.subr.bf16.mxu0 0
    %394 = vmatpush1.bf16.msra.mxu0 %v256
    %395 = vmatprep.subr.bf16.mxu0 0
    %396 = vmatpush1.bf16.msra.mxu0 %v255
    %397 = vmatprep.subr.bf16.mxu0 0
    %398 = vmatpush2.bf16.msra.mxu0 0
    %399 = vmatprep.subr.bf16.mxu0 0
    %400 = vmatpush2.bf16.msra.mxu0 0
    %401 = vmatprep.subr.bf16.mxu0 0
    %402 = vmatpush2.bf16.msra.mxu0 0
    %403 = vmatprep.subr.bf16.mxu0 0
    %404 = vmatpush2.bf16.msra.mxu0 0
    %405 = vmatprep.subr.bf16.mxu0 0
    %406 = vmatpush2.bf16.msra.mxu0 0
    %407 = vmatprep.subr.bf16.mxu0 0
    %408 = vmatpush2.bf16.msra.mxu0 0
    %409 = vmatprep.subr.bf16.mxu0 0
    %410 = vmatpush2.bf16.msra.mxu0 0
    %411 = vmatprep.subr.bf16.mxu0 0
    %412 = vmatpush2.bf16.msra.mxu0 0
    %413 = vmatprep.mubr.bf16.mxu0 0
    %414 = vmatmul.mubr.bf16.gmra.mxu0 %v379
    %v415 = vpop.f32.mrf.mxu0
    %v416 = vadd.f32 %v103, %v415
    %v417 = vpop.f32.mrf.mxu0
    %v418 = vpop.f32.mrf.mxu0
    %v419 = vpop.f32.mrf.mxu0
    %420 = vdwg.mxu0
    %421 = vmax.xlane.f32.xlu0 %v416
    %v422 = vpop.xlane.xlu0 %421
    %vm423 = vcmp.eq.f32.partialorder %v416, %v422
    %v424 = vsel %vm423, 1, 0
    %v425 = vcvt.s32.f32 %v424
    %v426 = vpack.c.bf16 %v425, %v425
    %427 = vmatprep.subr.bf16.mxu0 0
    %428 = vmatpush1.bf16.msra.mxu0 %v157
    %429 = vmatprep.subr.bf16.mxu0 0
    %430 = vmatpush1.bf16.msra.mxu0 %v156
    %431 = vmatprep.subr.bf16.mxu0 0
    %432 = vmatpush1.bf16.msra.mxu0 %v155
    %433 = vmatprep.subr.bf16.mxu0 0
    %434 = vmatpush1.bf16.msra.mxu0 %v154
    %435 = vmatprep.subr.bf16.mxu0 0
    %436 = vmatpush1.bf16.msra.mxu0 %v153
    %437 = vmatprep.subr.bf16.mxu0 0
    %438 = vmatpush1.bf16.msra.mxu0 %v152
    %439 = vmatprep.subr.bf16.mxu0 0
    %440 = vmatpush1.bf16.msra.mxu0 %v151
    %441 = vmatprep.subr.bf16.mxu0 0
    %442 = vmatpush1.bf16.msra.mxu0 %v150
    %443 = vmatprep.subr.bf16.mxu0 0
    %444 = vmatpush2.bf16.msra.mxu0 0
    %445 = vmatprep.subr.bf16.mxu0 0
    %446 = vmatpush2.bf16.msra.mxu0 0
    %447 = vmatprep.subr.bf16.mxu0 0
    %448 = vmatpush2.bf16.msra.mxu0 0
    %449 = vmatprep.subr.bf16.mxu0 0
    %450 = vmatpush2.bf16.msra.mxu0 0
    %451 = vmatprep.subr.bf16.mxu0 0
    %452 = vmatpush2.bf16.msra.mxu0 0
    %453 = vmatprep.subr.bf16.mxu0 0
    %454 = vmatpush2.bf16.msra.mxu0 0
    %455 = vmatprep.subr.bf16.mxu0 0
    %456 = vmatpush2.bf16.msra.mxu0 %v159
    %457 = vmatprep.subr.bf16.mxu0 0
    %458 = vmatpush2.bf16.msra.mxu0 %v158
    %459 = vmatprep.mubr.bf16.mxu0 %v379
    %460 = vmatmul.mubr.bf16.gmra.mxu0 %v426
    %v461 = vpop.f32.mrf.mxu0
    %v462 = vadd.f32 0.0, %v461
    %v463 = vpop.f32.mrf.mxu0
    %v464 = vpop.f32.mrf.mxu0
    %v465 = vpop.f32.mrf.mxu0
    %466 = vdwg.mxu0
    %v467 = vxor.u32 %v462, 2147483648
    %v468 = vmul.f32 %v467, 1.442695
    %v469 = vpow.pop %v468
    %v470 = vadd.f32 %v469, 1.0
    %v471 = vrcp.pop %v470
    %v472 = vmul.f32 1.0, %v471
    %474 = vrot.lane.b32.xlu0 %v462, 32
    %v475 = vpop.permute.xlu0 %474
    %v477 = vmul.f32 %v472, %v475
    %479 = vrot.lane.b32.xlu0 %v477, 64
    %v480 = vpop.permute.xlu0 %479
    %v482 = vadd.f32 %v462, %v480
    %v483 = vtanh.pop %v482
    %v484 = vsub.f32 1.0, %v472
    %486 = vrot.lane.b32.xlu0 %v483, 96
    %v487 = vpop.permute.xlu0 %486
    %v489 = vmul.f32 %v484, %v487
    %v490 = vmul.f32 %v472, %v373
    %v491 = vadd.f32 %v489, %v490
    %v492 = vpack.c.bf16 %v491, %v491
    %494 = vrot.lane.b32.xlu0 %v492, 96
    %v495 = vpop.permute.xlu0 %494
    %v497 = vsel %vm170, %v495, 0
    %499 = vmatprep.subr.bf16.mxu0 0
    %500 = vmatpush1.bf16.msra.mxu0 0
    %501 = vmatprep.subr.bf16.mxu0 0
    %502 = vmatpush1.bf16.msra.mxu0 0
    %503 = vmatprep.subr.bf16.mxu0 0
    %504 = vmatpush1.bf16.msra.mxu0 0
    %505 = vmatprep.subr.bf16.mxu0 0
    %506 = vmatpush1.bf16.msra.mxu0 0
    %507 = vmatprep.subr.bf16.mxu0 0
    %508 = vmatpush1.bf16.msra.mxu0 0
    %509 = vmatprep.subr.bf16.mxu0 0
    %510 = vmatpush1.bf16.msra.mxu0 0
    %511 = vmatprep.subr.bf16.mxu0 0
    %512 = vmatpush1.bf16.msra.mxu0 %v256
    %513 = vmatprep.subr.bf16.mxu0 0
    %514 = vmatpush1.bf16.msra.mxu0 %v255
    %515 = vmatprep.subr.bf16.mxu0 0
    %516 = vmatpush2.bf16.msra.mxu0 0
    %517 = vmatprep.subr.bf16.mxu0 0
    %518 = vmatpush2.bf16.msra.mxu0 0
    %519 = vmatprep.subr.bf16.mxu0 0
    %520 = vmatpush2.bf16.msra.mxu0 0
    %521 = vmatprep.subr.bf16.mxu0 0
    %522 = vmatpush2.bf16.msra.mxu0 0
    %523 = vmatprep.subr.bf16.mxu0 0
    %524 = vmatpush2.bf16.msra.mxu0 0
    %525 = vmatprep.subr.bf16.mxu0 0
    %526 = vmatpush2.bf16.msra.mxu0 0
    %527 = vmatprep.subr.bf16.mxu0 0
    %528 = vmatpush2.bf16.msra.mxu0 0
    %529 = vmatprep.subr.bf16.mxu0 0
    %530 = vmatpush2.bf16.msra.mxu0 0
    %531 = vmatprep.mubr.bf16.mxu0 0
    %532 = vmatmul.mubr.bf16.gmra.mxu0 %v497
    %v533 = vpop.f32.mrf.mxu0
    %v534 = vadd.f32 %v103, %v533
    %v535 = vpop.f32.mrf.mxu0
    %v536 = vpop.f32.mrf.mxu0
    %v537 = vpop.f32.mrf.mxu0
    %538 = vdwg.mxu0
    %539 = vmax.xlane.f32.xlu0 %v534
    %v540 = vpop.xlane.xlu0 %539
    %vm541 = vcmp.eq.f32.partialorder %v534, %v540
    %v542 = vsel %vm541, 1, 0
    %v543 = vcvt.s32.f32 %v542
    %v544 = vpack.c.bf16 %v543, %v543
    %545 = vmatprep.subr.bf16.mxu0 0
    %546 = vmatpush1.bf16.msra.mxu0 %v157
    %547 = vmatprep.subr.bf16.mxu0 0
    %548 = vmatpush1.bf16.msra.mxu0 %v156
    %549 = vmatprep.subr.bf16.mxu0 0
    %550 = vmatpush1.bf16.msra.mxu0 %v155
    %551 = vmatprep.subr.bf16.mxu0 0
    %552 = vmatpush1.bf16.msra.mxu0 %v154
    %553 = vmatprep.subr.bf16.mxu0 0
    %554 = vmatpush1.bf16.msra.mxu0 %v153
    %555 = vmatprep.subr.bf16.mxu0 0
    %556 = vmatpush1.bf16.msra.mxu0 %v152
    %557 = vmatprep.subr.bf16.mxu0 0
    %558 = vmatpush1.bf16.msra.mxu0 %v151
    %559 = vmatprep.subr.bf16.mxu0 0
    %560 = vmatpush1.bf16.msra.mxu0 %v150
    %561 = vmatprep.subr.bf16.mxu0 0
    %562 = vmatpush2.bf16.msra.mxu0 0
    %563 = vmatprep.subr.bf16.mxu0 0
    %564 = vmatpush2.bf16.msra.mxu0 0
    %565 = vmatprep.subr.bf16.mxu0 0
    %566 = vmatpush2.bf16.msra.mxu0 0
    %567 = vmatprep.subr.bf16.mxu0 0
    %568 = vmatpush2.bf16.msra.mxu0 0
    %569 = vmatprep.subr.bf16.mxu0 0
    %570 = vmatpush2.bf16.msra.mxu0 0
    %571 = vmatprep.subr.bf16.mxu0 0
    %572 = vmatpush2.bf16.msra.mxu0 0
    %573 = vmatprep.subr.bf16.mxu0 0
    %574 = vmatpush2.bf16.msra.mxu0 %v159
    %575 = vmatprep.subr.bf16.mxu0 0
    %576 = vmatpush2.bf16.msra.mxu0 %v158
    %577 = vmatprep.mubr.bf16.mxu0 %v497
    %578 = vmatmul.mubr.bf16.gmra.mxu0 %v544
    %v579 = vpop.f32.mrf.mxu0
    %v580 = vadd.f32 0.0, %v579
    %v581 = vpop.f32.mrf.mxu0
    %v582 = vpop.f32.mrf.mxu0
    %v583 = vpop.f32.mrf.mxu0
    %584 = vdwg.mxu0
    %v585 = vxor.u32 %v580, 2147483648
    %v586 = vmul.f32 %v585, 1.442695
    %v587 = vpow.pop %v586
    %v588 = vadd.f32 %v587, 1.0
    %v589 = vrcp.pop %v588
    %v590 = vmul.f32 1.0, %v589
    %592 = vrot.lane.b32.xlu0 %v580, 32
    %v593 = vpop.permute.xlu0 %592
    %v595 = vmul.f32 %v590, %v593
    %597 = vrot.lane.b32.xlu0 %v595, 64
    %v598 = vpop.permute.xlu0 %597
    %v600 = vadd.f32 %v580, %v598
    %v601 = vtanh.pop %v600
    %v602 = vsub.f32 1.0, %v590
    %604 = vrot.lane.b32.xlu0 %v601, 96
    %v605 = vpop.permute.xlu0 %604
    %v607 = vmul.f32 %v602, %v605
    %v608 = vmul.f32 %v590, %v491
    %v609 = vadd.f32 %v607, %v608
    %v610 = vpack.c.bf16 %v609, %v609
    %612 = vrot.lane.b32.xlu0 %v610, 96
    %v613 = vpop.permute.xlu0 %612
    %v615 = vsel %vm170, %v613, 0
    %617 = vmatprep.subr.bf16.mxu0 0
    %618 = vmatpush1.bf16.msra.mxu0 0
    %619 = vmatprep.subr.bf16.mxu0 0
    %620 = vmatpush1.bf16.msra.mxu0 0
    %621 = vmatprep.subr.bf16.mxu0 0
    %622 = vmatpush1.bf16.msra.mxu0 0
    %623 = vmatprep.subr.bf16.mxu0 0
    %624 = vmatpush1.bf16.msra.mxu0 0
    %625 = vmatprep.subr.bf16.mxu0 0
    %626 = vmatpush1.bf16.msra.mxu0 0
    %627 = vmatprep.subr.bf16.mxu0 0
    %628 = vmatpush1.bf16.msra.mxu0 0
    %629 = vmatprep.subr.bf16.mxu0 0
    %630 = vmatpush1.bf16.msra.mxu0 %v256
    %631 = vmatprep.subr.bf16.mxu0 0
    %632 = vmatpush1.bf16.msra.mxu0 %v255
    %633 = vmatprep.subr.bf16.mxu0 0
    %634 = vmatpush2.bf16.msra.mxu0 0
    %635 = vmatprep.subr.bf16.mxu0 0
    %636 = vmatpush2.bf16.msra.mxu0 0
    %637 = vmatprep.subr.bf16.mxu0 0
    %638 = vmatpush2.bf16.msra.mxu0 0
    %639 = vmatprep.subr.bf16.mxu0 0
    %640 = vmatpush2.bf16.msra.mxu0 0
    %641 = vmatprep.subr.bf16.mxu0 0
    %642 = vmatpush2.bf16.msra.mxu0 0
    %643 = vmatprep.subr.bf16.mxu0 0
    %644 = vmatpush2.bf16.msra.mxu0 0
    %645 = vmatprep.subr.bf16.mxu0 0
    %646 = vmatpush2.bf16.msra.mxu0 0
    %647 = vmatprep.subr.bf16.mxu0 0
    %648 = vmatpush2.bf16.msra.mxu0 0
    %649 = vmatprep.mubr.bf16.mxu0 0
    %650 = vmatmul.mubr.bf16.gmra.mxu0 %v615
    %v651 = vpop.f32.mrf.mxu0
    %v652 = vadd.f32 %v103, %v651
    %v653 = vpop.f32.mrf.mxu0
    %v654 = vpop.f32.mrf.mxu0
    %v655 = vpop.f32.mrf.mxu0
    %656 = vdwg.mxu0
    %657 = vmax.xlane.f32.xlu0 %v652
    %v658 = vpop.xlane.xlu0 %657
    %vm659 = vcmp.eq.f32.partialorder %v652, %v658
    %v660 = vsel %vm659, 1, 0
    %v661 = vcvt.s32.f32 %v660
    %v662 = vpack.c.bf16 %v661, %v661
    %663 = vmatprep.subr.bf16.mxu0 0
    %664 = vmatpush1.bf16.msra.mxu0 %v157
    %665 = vmatprep.subr.bf16.mxu0 0
    %666 = vmatpush1.bf16.msra.mxu0 %v156
    %667 = vmatprep.subr.bf16.mxu0 0
    %668 = vmatpush1.bf16.msra.mxu0 %v155
    %669 = vmatprep.subr.bf16.mxu0 0
    %670 = vmatpush1.bf16.msra.mxu0 %v154
    %671 = vmatprep.subr.bf16.mxu0 0
    %672 = vmatpush1.bf16.msra.mxu0 %v153
    %673 = vmatprep.subr.bf16.mxu0 0
    %674 = vmatpush1.bf16.msra.mxu0 %v152
    %675 = vmatprep.subr.bf16.mxu0 0
    %676 = vmatpush1.bf16.msra.mxu0 %v151
    %677 = vmatprep.subr.bf16.mxu0 0
    %678 = vmatpush1.bf16.msra.mxu0 %v150
    %679 = vmatprep.subr.bf16.mxu0 0
    %680 = vmatpush2.bf16.msra.mxu0 0
    %681 = vmatprep.subr.bf16.mxu0 0
    %682 = vmatpush2.bf16.msra.mxu0 0
    %683 = vmatprep.subr.bf16.mxu0 0
    %684 = vmatpush2.bf16.msra.mxu0 0
    %685 = vmatprep.subr.bf16.mxu0 0
    %686 = vmatpush2.bf16.msra.mxu0 0
    %687 = vmatprep.subr.bf16.mxu0 0
    %688 = vmatpush2.bf16.msra.mxu0 0
    %689 = vmatprep.subr.bf16.mxu0 0
    %690 = vmatpush2.bf16.msra.mxu0 0
    %691 = vmatprep.subr.bf16.mxu0 0
    %692 = vmatpush2.bf16.msra.mxu0 %v159
    %693 = vmatprep.subr.bf16.mxu0 0
    %694 = vmatpush2.bf16.msra.mxu0 %v158
    %695 = vmatprep.mubr.bf16.mxu0 %v615
    %696 = vmatmul.mubr.bf16.gmra.mxu0 %v662
    %v697 = vpop.f32.mrf.mxu0
    %v698 = vadd.f32 0.0, %v697
    %v699 = vpop.f32.mrf.mxu0
    %v700 = vpop.f32.mrf.mxu0
    %v701 = vpop.f32.mrf.mxu0
    %702 = vdwg.mxu0
    %v703 = vxor.u32 %v698, 2147483648
    %v704 = vmul.f32 %v703, 1.442695
    %v705 = vpow.pop %v704
    %v706 = vadd.f32 %v705, 1.0
    %v707 = vrcp.pop %v706
    %v708 = vmul.f32 1.0, %v707
    %710 = vrot.lane.b32.xlu0 %v698, 32
    %v711 = vpop.permute.xlu0 %710
    %v713 = vmul.f32 %v708, %v711
    %715 = vrot.lane.b32.xlu0 %v713, 64
    %v716 = vpop.permute.xlu0 %715
    %v718 = vadd.f32 %v698, %v716
    %v719 = vtanh.pop %v718
    %v720 = vsub.f32 1.0, %v708
    %722 = vrot.lane.b32.xlu0 %v719, 96
    %v723 = vpop.permute.xlu0 %722
    %v725 = vmul.f32 %v720, %v723
    %v726 = vmul.f32 %v708, %v609
    %v727 = vadd.f32 %v725, %v726
    %v728 = vpack.c.bf16 %v727, %v727
    %730 = vrot.lane.b32.xlu0 %v728, 96
    %v731 = vpop.permute.xlu0 %730
    %v733 = vsel %vm170, %v731, 0
    %735 = vmatprep.subr.bf16.mxu0 0
    %736 = vmatpush1.bf16.msra.mxu0 0
    %737 = vmatprep.subr.bf16.mxu0 0
    %738 = vmatpush1.bf16.msra.mxu0 0
    %739 = vmatprep.subr.bf16.mxu0 0
    %740 = vmatpush1.bf16.msra.mxu0 0
    %741 = vmatprep.subr.bf16.mxu0 0
    %742 = vmatpush1.bf16.msra.mxu0 0
    %743 = vmatprep.subr.bf16.mxu0 0
    %744 = vmatpush1.bf16.msra.mxu0 0
    %745 = vmatprep.subr.bf16.mxu0 0
    %746 = vmatpush1.bf16.msra.mxu0 0
    %747 = vmatprep.subr.bf16.mxu0 0
    %748 = vmatpush1.bf16.msra.mxu0 %v256
    %749 = vmatprep.subr.bf16.mxu0 0
    %750 = vmatpush1.bf16.msra.mxu0 %v255
    %751 = vmatprep.subr.bf16.mxu0 0
    %752 = vmatpush2.bf16.msra.mxu0 0
    %753 = vmatprep.subr.bf16.mxu0 0
    %754 = vmatpush2.bf16.msra.mxu0 0
    %755 = vmatprep.subr.bf16.mxu0 0
    %756 = vmatpush2.bf16.msra.mxu0 0
    %757 = vmatprep.subr.bf16.mxu0 0
    %758 = vmatpush2.bf16.msra.mxu0 0
    %759 = vmatprep.subr.bf16.mxu0 0
    %760 = vmatpush2.bf16.msra.mxu0 0
    %761 = vmatprep.subr.bf16.mxu0 0
    %762 = vmatpush2.bf16.msra.mxu0 0
    %763 = vmatprep.subr.bf16.mxu0 0
    %764 = vmatpush2.bf16.msra.mxu0 0
    %765 = vmatprep.subr.bf16.mxu0 0
    %766 = vmatpush2.bf16.msra.mxu0 0
    %767 = vmatprep.mubr.bf16.mxu0 0
    %768 = vmatmul.mubr.bf16.gmra.mxu0 %v733
    %v769 = vpop.f32.mrf.mxu0
    %v770 = vadd.f32 %v103, %v769
    %v771 = vpop.f32.mrf.mxu0
    %v772 = vpop.f32.mrf.mxu0
    %v773 = vpop.f32.mrf.mxu0
    %774 = vdwg.mxu0
    %775 = vmax.xlane.f32.xlu0 %v770
    %v776 = vpop.xlane.xlu0 %775
    %vm777 = vcmp.eq.f32.partialorder %v770, %v776
    %v778 = vsel %vm777, 1, 0
    %v779 = vcvt.s32.f32 %v778
    %v780 = vpack.c.bf16 %v779, %v779
    %781 = vmatprep.subr.bf16.mxu0 0
    %782 = vmatpush1.bf16.msra.mxu0 %v157
    %783 = vmatprep.subr.bf16.mxu0 0
    %784 = vmatpush1.bf16.msra.mxu0 %v156
    %785 = vmatprep.subr.bf16.mxu0 0
    %786 = vmatpush1.bf16.msra.mxu0 %v155
    %787 = vmatprep.subr.bf16.mxu0 0
    %788 = vmatpush1.bf16.msra.mxu0 %v154
    %789 = vmatprep.subr.bf16.mxu0 0
    %790 = vmatpush1.bf16.msra.mxu0 %v153
    %791 = vmatprep.subr.bf16.mxu0 0
    %792 = vmatpush1.bf16.msra.mxu0 %v152
    %793 = vmatprep.subr.bf16.mxu0 0
    %794 = vmatpush1.bf16.msra.mxu0 %v151
    %795 = vmatprep.subr.bf16.mxu0 0
    %796 = vmatpush1.bf16.msra.mxu0 %v150
    %797 = vmatprep.subr.bf16.mxu0 0
    %798 = vmatpush2.bf16.msra.mxu0 0
    %799 = vmatprep.subr.bf16.mxu0 0
    %800 = vmatpush2.bf16.msra.mxu0 0
    %801 = vmatprep.subr.bf16.mxu0 0
    %802 = vmatpush2.bf16.msra.mxu0 0
    %803 = vmatprep.subr.bf16.mxu0 0
    %804 = vmatpush2.bf16.msra.mxu0 0
    %805 = vmatprep.subr.bf16.mxu0 0
    %806 = vmatpush2.bf16.msra.mxu0 0
    %807 = vmatprep.subr.bf16.mxu0 0
    %808 = vmatpush2.bf16.msra.mxu0 0
    %809 = vmatprep.subr.bf16.mxu0 0
    %810 = vmatpush2.bf16.msra.mxu0 %v159
    %811 = vmatprep.subr.bf16.mxu0 0
    %812 = vmatpush2.bf16.msra.mxu0 %v158
    %813 = vmatprep.mubr.bf16.mxu0 %v733
    %814 = vmatmul.mubr.bf16.gmra.mxu0 %v780
    %v815 = vpop.f32.mrf.mxu0
    %v816 = vadd.f32 0.0, %v815
    %v817 = vpop.f32.mrf.mxu0
    %v818 = vpop.f32.mrf.mxu0
    %v819 = vpop.f32.mrf.mxu0
    %820 = vdwg.mxu0
    %v821 = vxor.u32 %v816, 2147483648
    %v822 = vmul.f32 %v821, 1.442695
    %v823 = vpow.pop %v822
    %v824 = vadd.f32 %v823, 1.0
    %v825 = vrcp.pop %v824
    %v826 = vmul.f32 1.0, %v825
    %828 = vrot.lane.b32.xlu0 %v816, 32
    %v829 = vpop.permute.xlu0 %828
    %v831 = vmul.f32 %v826, %v829
    %833 = vrot.lane.b32.xlu0 %v831, 64
    %v834 = vpop.permute.xlu0 %833
    %v836 = vadd.f32 %v816, %v834
    %v837 = vtanh.pop %v836
    %v838 = vsub.f32 1.0, %v826
    %840 = vrot.lane.b32.xlu0 %v837, 96
    %v841 = vpop.permute.xlu0 %840
    %v843 = vmul.f32 %v838, %v841
    %v844 = vmul.f32 %v826, %v727
    %v845 = vadd.f32 %v843, %v844
    %v846 = vpack.c.bf16 %v845, %v845
    %848 = vrot.lane.b32.xlu0 %v846, 96
    %v849 = vpop.permute.xlu0 %848
    %v851 = vsel %vm170, %v849, 0
    %853 = vmatprep.subr.bf16.mxu0 0
    %854 = vmatpush1.bf16.msra.mxu0 0
    %855 = vmatprep.subr.bf16.mxu0 0
    %856 = vmatpush1.bf16.msra.mxu0 0
    %857 = vmatprep.subr.bf16.mxu0 0
    %858 = vmatpush1.bf16.msra.mxu0 0
    %859 = vmatprep.subr.bf16.mxu0 0
    %860 = vmatpush1.bf16.msra.mxu0 0
    %861 = vmatprep.subr.bf16.mxu0 0
    %862 = vmatpush1.bf16.msra.mxu0 0
    %863 = vmatprep.subr.bf16.mxu0 0
    %864 = vmatpush1.bf16.msra.mxu0 0
    %865 = vmatprep.subr.bf16.mxu0 0
    %866 = vmatpush1.bf16.msra.mxu0 %v256
    %867 = vmatprep.subr.bf16.mxu0 0
    %868 = vmatpush1.bf16.msra.mxu0 %v255
    %869 = vmatprep.subr.bf16.mxu0 0
    %870 = vmatpush2.bf16.msra.mxu0 0
    %871 = vmatprep.subr.bf16.mxu0 0
    %872 = vmatpush2.bf16.msra.mxu0 0
    %873 = vmatprep.subr.bf16.mxu0 0
    %874 = vmatpush2.bf16.msra.mxu0 0
    %875 = vmatprep.subr.bf16.mxu0 0
    %876 = vmatpush2.bf16.msra.mxu0 0
    %877 = vmatprep.subr.bf16.mxu0 0
    %878 = vmatpush2.bf16.msra.mxu0 0
    %879 = vmatprep.subr.bf16.mxu0 0
    %880 = vmatpush2.bf16.msra.mxu0 0
    %881 = vmatprep.subr.bf16.mxu0 0
    %882 = vmatpush2.bf16.msra.mxu0 0
    %883 = vmatprep.subr.bf16.mxu0 0
    %884 = vmatpush2.bf16.msra.mxu0 0
    %885 = vmatprep.mubr.bf16.mxu0 0
    %886 = vmatmul.mubr.bf16.gmra.mxu0 %v851
    %v887 = vpop.f32.mrf.mxu0
    %v888 = vadd.f32 %v103, %v887
    %v889 = vpop.f32.mrf.mxu0
    %v890 = vpop.f32.mrf.mxu0
    %v891 = vpop.f32.mrf.mxu0
    %892 = vdwg.mxu0
    %893 = vmax.xlane.f32.xlu0 %v888
    %v894 = vpop.xlane.xlu0 %893
    %vm895 = vcmp.eq.f32.partialorder %v888, %v894
    %v896 = vsel %vm895, 1, 0
    %v897 = vcvt.s32.f32 %v896
    %v898 = vpack.c.bf16 %v897, %v897
    %899 = vmatprep.subr.bf16.mxu0 0
    %900 = vmatpush1.bf16.msra.mxu0 %v157
    %901 = vmatprep.subr.bf16.mxu0 0
    %902 = vmatpush1.bf16.msra.mxu0 %v156
    %903 = vmatprep.subr.bf16.mxu0 0
    %904 = vmatpush1.bf16.msra.mxu0 %v155
    %905 = vmatprep.subr.bf16.mxu0 0
    %906 = vmatpush1.bf16.msra.mxu0 %v154
    %907 = vmatprep.subr.bf16.mxu0 0
    %908 = vmatpush1.bf16.msra.mxu0 %v153
    %909 = vmatprep.subr.bf16.mxu0 0
    %910 = vmatpush1.bf16.msra.mxu0 %v152
    %911 = vmatprep.subr.bf16.mxu0 0
    %912 = vmatpush1.bf16.msra.mxu0 %v151
    %913 = vmatprep.subr.bf16.mxu0 0
    %914 = vmatpush1.bf16.msra.mxu0 %v150
    %915 = vmatprep.subr.bf16.mxu0 0
    %916 = vmatpush2.bf16.msra.mxu0 0
    %917 = vmatprep.subr.bf16.mxu0 0
    %918 = vmatpush2.bf16.msra.mxu0 0
    %919 = vmatprep.subr.bf16.mxu0 0
    %920 = vmatpush2.bf16.msra.mxu0 0
    %921 = vmatprep.subr.bf16.mxu0 0
    %922 = vmatpush2.bf16.msra.mxu0 0
    %923 = vmatprep.subr.bf16.mxu0 0
    %924 = vmatpush2.bf16.msra.mxu0 0
    %925 = vmatprep.subr.bf16.mxu0 0
    %926 = vmatpush2.bf16.msra.mxu0 0
    %927 = vmatprep.subr.bf16.mxu0 0
    %928 = vmatpush2.bf16.msra.mxu0 %v159
    %929 = vmatprep.subr.bf16.mxu0 0
    %930 = vmatpush2.bf16.msra.mxu0 %v158
    %931 = vmatprep.mubr.bf16.mxu0 %v851
    %932 = vmatmul.mubr.bf16.gmra.mxu0 %v898
    %v933 = vpop.f32.mrf.mxu0
    %v934 = vadd.f32 0.0, %v933
    %v935 = vpop.f32.mrf.mxu0
    %v936 = vpop.f32.mrf.mxu0
    %v937 = vpop.f32.mrf.mxu0
    %938 = vdwg.mxu0
    %v939 = vxor.u32 %v934, 2147483648
    %v940 = vmul.f32 %v939, 1.442695
    %v941 = vpow.pop %v940
    %v942 = vadd.f32 %v941, 1.0
    %v943 = vrcp.pop %v942
    %v944 = vmul.f32 1.0, %v943
    %946 = vrot.lane.b32.xlu0 %v934, 32
    %v947 = vpop.permute.xlu0 %946
    %v949 = vmul.f32 %v944, %v947
    %951 = vrot.lane.b32.xlu0 %v949, 64
    %v952 = vpop.permute.xlu0 %951
    %v954 = vadd.f32 %v934, %v952
    %v955 = vtanh.pop %v954
    %v956 = vsub.f32 1.0, %v944
    %958 = vrot.lane.b32.xlu0 %v955, 96
    %v959 = vpop.permute.xlu0 %958
    %v961 = vmul.f32 %v956, %v959
    %v962 = vmul.f32 %v944, %v845
    %v963 = vadd.f32 %v961, %v962
    %v964 = vpack.c.bf16 %v963, %v963
    %966 = vrot.lane.b32.xlu0 %v964, 96
    %v967 = vpop.permute.xlu0 %966
    %v969 = vsel %vm170, %v967, 0
    %971 = vmatprep.subr.bf16.mxu0 0
    %972 = vmatpush1.bf16.msra.mxu0 0
    %973 = vmatprep.subr.bf16.mxu0 0
    %974 = vmatpush1.bf16.msra.mxu0 0
    %975 = vmatprep.subr.bf16.mxu0 0
    %976 = vmatpush1.bf16.msra.mxu0 0
    %977 = vmatprep.subr.bf16.mxu0 0
    %978 = vmatpush1.bf16.msra.mxu0 0
    %979 = vmatprep.subr.bf16.mxu0 0
    %980 = vmatpush1.bf16.msra.mxu0 0
    %981 = vmatprep.subr.bf16.mxu0 0
    %982 = vmatpush1.bf16.msra.mxu0 0
    %983 = vmatprep.subr.bf16.mxu0 0
    %984 = vmatpush1.bf16.msra.mxu0 %v256
    %985 = vmatprep.subr.bf16.mxu0 0
    %986 = vmatpush1.bf16.msra.mxu0 %v255
    %987 = vmatprep.subr.bf16.mxu0 0
    %988 = vmatpush2.bf16.msra.mxu0 0
    %989 = vmatprep.subr.bf16.mxu0 0
    %990 = vmatpush2.bf16.msra.mxu0 0
    %991 = vmatprep.subr.bf16.mxu0 0
    %992 = vmatpush2.bf16.msra.mxu0 0
    %993 = vmatprep.subr.bf16.mxu0 0
    %994 = vmatpush2.bf16.msra.mxu0 0
    %995 = vmatprep.subr.bf16.mxu0 0
    %996 = vmatpush2.bf16.msra.mxu0 0
    %997 = vmatprep.subr.bf16.mxu0 0
    %998 = vmatpush2.bf16.msra.mxu0 0
    %999 = vmatprep.subr.bf16.mxu0 0
    %1000 = vmatpush2.bf16.msra.mxu0 0
    %1001 = vmatprep.subr.bf16.mxu0 0
    %1002 = vmatpush2.bf16.msra.mxu0 0
    %1003 = vmatprep.mubr.bf16.mxu0 0
    %1004 = vmatmul.mubr.bf16.gmra.mxu0 %v969
    %v1005 = vpop.f32.mrf.mxu0
    %v1006 = vadd.f32 %v103, %v1005
    %v1007 = vpop.f32.mrf.mxu0
    %v1008 = vpop.f32.mrf.mxu0
    %v1009 = vpop.f32.mrf.mxu0
    %1010 = vdwg.mxu0
    %1011 = vmax.xlane.f32.xlu0 %v1006
    %v1012 = vpop.xlane.xlu0 %1011
    %vm1013 = vcmp.eq.f32.partialorder %v1006, %v1012
    %1015 = vrot.lane.b32.xlu0 %v963, 96
    %v1016 = vpop.permute.xlu0 %1015
    %1018 = vst.msk [vmem:[#allocation13] sm:$0xff] %vm170, %v1016
    %1019 = vmax.xlane.f32.xlu0 %v297
    %v1020 = vpop.xlane.xlu0 %1019
    %v1021 = vsub.f32 %v297, %v1020
    %v1022 = vmul.f32 %v1021, 1.442695
    %v1023 = vpow.pop %v1022
    %1024 = vadd.xlane.f32.xlu0 %v1023
    %v1025 = vpop.xlane.xlu0 %1024
    %v1026 = vlog2.pop %v1025
    %v1027 = vmul.f32 %v1026, 0.6931472
    %v1028 = vsub.f32 %v1021, %v1027
    %1029 = vst [vmem:[#allocation10] sm:$0xff] %v1028
    %v1030 = vsel %vm305, %v105, 128
    %v1031 = vand.u32 %v1030, 65535
    %v1032 = vshra.s32 %v1030, 16
    %v1033 = vcvt.s32.f32 %v1031
    %v1034 = vcvt.s32.f32 %v1032
    %1035 = vmin.xlane.f32.xlu0 %v1034
    %v1036 = vpop.xlane.xlu0 %1035
    %vm1037 = vcmp.eq.f32.partialorder %v1034, %v1036
    %v1038 = vsel %vm1037, %v1033, inf
    %1039 = vmin.xlane.f32.xlu0 %v1038
    %v1040 = vpop.xlane.xlu0 %1039
    %v1041 = vcvt.f32.s32 %v1040
    %v1042 = vcvt.f32.s32 %v1036
    %v1043 = vshll.u32 %v1042, 16
    %v1044 = vadd.s32 %v1043, %v1041
    %v1045 = vlaneseq
    %v1046 = vshrl.u32 %v1045, 7
    %v1047 = vsub.s32 %v105, %v1046
    %v1048 = vrot.slane %v1044, %v1047
    %vm1049 = vcmask 57344
    %1050 = vst.msk [vmem:[#allocation11] sm:$0x1] %vm1049, %v1048
    %vm1051 = vcmp.eq.s32.totalorder %v1044, 3
    %v1052 = vsel %vm1051, 1, 7
    %v1053 = vsel %vm1051, %v1052, 7
    %v1054 = vsub.f32 %v416, %v422
    %v1055 = vmul.f32 %v1054, 1.442695
    %v1056 = vpow.pop %v1055
    %1057 = vadd.xlane.f32.xlu0 %v1056
    %v1058 = vpop.xlane.xlu0 %1057
    %v1059 = vlog2.pop %v1058
    %v1060 = vmul.f32 %v1059, 0.6931472
    %v1061 = vsub.f32 %v1054, %v1060
    %s1062 = scalar_lea.vmem [#allocation10], 8
    %1063 = vst [vmem:[%s1062] sm:$0xff] %v1061
    %v1064 = vsel %vm423, %v105, 128
    %v1065 = vand.u32 %v1064, 65535
    %v1066 = vshra.s32 %v1064, 16
    %v1067 = vcvt.s32.f32 %v1065
    %v1068 = vcvt.s32.f32 %v1066
    %1069 = vmin.xlane.f32.xlu0 %v1068
    %v1070 = vpop.xlane.xlu0 %1069
    %vm1071 = vcmp.eq.f32.partialorder %v1068, %v1070
    %v1072 = vsel %vm1071, %v1067, inf
    %1073 = vmin.xlane.f32.xlu0 %v1072
    %v1074 = vpop.xlane.xlu0 %1073
    %v1075 = vcvt.f32.s32 %v1074
    %v1076 = vcvt.f32.s32 %v1070
    %v1077 = vshll.u32 %v1076, 16
    %v1078 = vadd.s32 %v1077, %v1075
    %v1079 = vlaneseq
    %v1080 = vshrl.u32 %v1079, 7
    %v1081 = vsub.s32 %v105, %v1080
    %v1082 = vrot.slane %v1078, %v1081
    %1083 = vst.msk [vmem:[#allocation11 + $0x1] sm:$0x1] %vm1049, %v1082
    %vm1084 = vcmp.eq.s32.totalorder %v1078, 3
    %v1085 = vsel %vm1084, 2, 7
    %vm1086 = vcmp.lt.s32.totalorder %v1053, %v1085
    %v1087 = vsel %vm1086, %v1053, %v1085
    %v1088 = vsub.f32 %v534, %v540
    %v1089 = vmul.f32 %v1088, 1.442695
    %v1090 = vpow.pop %v1089
    %1091 = vadd.xlane.f32.xlu0 %v1090
    %v1092 = vpop.xlane.xlu0 %1091
    %v1093 = vlog2.pop %v1092
    %v1094 = vmul.f32 %v1093, 0.6931472
    %v1095 = vsub.f32 %v1088, %v1094
    %s1096 = scalar_lea.vmem [#allocation10], 16
    %1097 = vst [vmem:[%s1096] sm:$0xff] %v1095
    %v1098 = vsel %vm541, %v105, 128
    %v1099 = vand.u32 %v1098, 65535
    %v1100 = vshra.s32 %v1098, 16
    %v1101 = vcvt.s32.f32 %v1099
    %v1102 = vcvt.s32.f32 %v1100
    %1103 = vmin.xlane.f32.xlu0 %v1102
    %v1104 = vpop.xlane.xlu0 %1103
    %vm1105 = vcmp.eq.f32.partialorder %v1102, %v1104
    %v1106 = vsel %vm1105, %v1101, inf
    %1107 = vmin.xlane.f32.xlu0 %v1106
    %v1108 = vpop.xlane.xlu0 %1107
    %v1109 = vcvt.f32.s32 %v1108
    %v1110 = vcvt.f32.s32 %v1104
    %v1111 = vshll.u32 %v1110, 16
    %v1112 = vadd.s32 %v1111, %v1109
    %v1113 = vlaneseq
    %v1114 = vshrl.u32 %v1113, 7
    %v1115 = vsub.s32 %v105, %v1114
    %v1116 = vrot.slane %v1112, %v1115
    %1117 = vst.msk [vmem:[#allocation11 + $0x2] sm:$0x1] %vm1049, %v1116
    %vm1118 = vcmp.eq.s32.totalorder %v1112, 3
    %v1119 = vsel %vm1118, 3, 7
    %vm1120 = vcmp.lt.s32.totalorder %v1087, %v1119
    %v1121 = vsel %vm1120, %v1087, %v1119
    %v1122 = vsub.f32 %v652, %v658
    %v1123 = vmul.f32 %v1122, 1.442695
    %v1124 = vpow.pop %v1123
    %1125 = vadd.xlane.f32.xlu0 %v1124
    %v1126 = vpop.xlane.xlu0 %1125
    %v1127 = vlog2.pop %v1126
    %v1128 = vmul.f32 %v1127, 0.6931472
    %v1129 = vsub.f32 %v1122, %v1128
    %s1130 = scalar_lea.vmem [#allocation10], 24
    %1131 = vst [vmem:[%s1130] sm:$0xff] %v1129
    %v1132 = vsel %vm659, %v105, 128
    %v1133 = vand.u32 %v1132, 65535
    %v1134 = vshra.s32 %v1132, 16
    %v1135 = vcvt.s32.f32 %v1133
    %v1136 = vcvt.s32.f32 %v1134
    %1137 = vmin.xlane.f32.xlu0 %v1136
    %v1138 = vpop.xlane.xlu0 %1137
    %vm1139 = vcmp.eq.f32.partialorder %v1136, %v1138
    %v1140 = vsel %vm1139, %v1135, inf
    %1141 = vmin.xlane.f32.xlu0 %v1140
    %v1142 = vpop.xlane.xlu0 %1141
    %v1143 = vcvt.f32.s32 %v1142
    %v1144 = vcvt.f32.s32 %v1138
    %v1145 = vshll.u32 %v1144, 16
    %v1146 = vadd.s32 %v1145, %v1143
    %v1147 = vlaneseq
    %v1148 = vshrl.u32 %v1147, 7
    %v1149 = vsub.s32 %v105, %v1148
    %v1150 = vrot.slane %v1146, %v1149
    %1151 = vst.msk [vmem:[#allocation11 + $0x3] sm:$0x1] %vm1049, %v1150
    %vm1152 = vcmp.eq.s32.totalorder %v1146, 3
    %v1153 = vsel %vm1152, 4, 7
    %vm1154 = vcmp.lt.s32.totalorder %v1121, %v1153
    %v1155 = vsel %vm1154, %v1121, %v1153
    %v1156 = vsub.f32 %v770, %v776
    %v1157 = vmul.f32 %v1156, 1.442695
    %v1158 = vpow.pop %v1157
    %1159 = vadd.xlane.f32.xlu0 %v1158
    %v1160 = vpop.xlane.xlu0 %1159
    %v1161 = vlog2.pop %v1160
    %v1162 = vmul.f32 %v1161, 0.6931472
    %v1163 = vsub.f32 %v1156, %v1162
    %s1164 = scalar_lea.vmem [#allocation10], 32
    %1165 = vst [vmem:[%s1164] sm:$0xff] %v1163
    %v1166 = vsel %vm777, %v105, 128
    %v1167 = vand.u32 %v1166, 65535
    %v1168 = vshra.s32 %v1166, 16
    %v1169 = vcvt.s32.f32 %v1167
    %v1170 = vcvt.s32.f32 %v1168
    %1171 = vmin.xlane.f32.xlu0 %v1170
    %v1172 = vpop.xlane.xlu0 %1171
    %vm1173 = vcmp.eq.f32.partialorder %v1170, %v1172
    %v1174 = vsel %vm1173, %v1169, inf
    %1175 = vmin.xlane.f32.xlu0 %v1174
    %v1176 = vpop.xlane.xlu0 %1175
    %v1177 = vcvt.f32.s32 %v1176
    %v1178 = vcvt.f32.s32 %v1172
    %v1179 = vshll.u32 %v1178, 16
    %v1180 = vadd.s32 %v1179, %v1177
    %v1181 = vlaneseq
    %v1182 = vshrl.u32 %v1181, 7
    %v1183 = vsub.s32 %v105, %v1182
    %v1184 = vrot.slane %v1180, %v1183
    %1185 = vst.msk [vmem:[#allocation11 + $0x4] sm:$0x1] %vm1049, %v1184
    %vm1186 = vcmp.eq.s32.totalorder %v1180, 3
    %v1187 = vsel %vm1186, 5, 7
    %vm1188 = vcmp.lt.s32.totalorder %v1155, %v1187
    %v1189 = vsel %vm1188, %v1155, %v1187
    %v1190 = vsub.f32 %v888, %v894
    %v1191 = vmul.f32 %v1190, 1.442695
    %v1192 = vpow.pop %v1191
    %1193 = vadd.xlane.f32.xlu0 %v1192
    %v1194 = vpop.xlane.xlu0 %1193
    %v1195 = vlog2.pop %v1194
    %v1196 = vmul.f32 %v1195, 0.6931472
    %v1197 = vsub.f32 %v1190, %v1196
    %s1198 = scalar_lea.vmem [#allocation10], 40
    %1199 = vst [vmem:[%s1198] sm:$0xff] %v1197
    %v1200 = vsel %vm895, %v105, 128
    %v1201 = vand.u32 %v1200, 65535
    %v1202 = vshra.s32 %v1200, 16
    %v1203 = vcvt.s32.f32 %v1201
    %v1204 = vcvt.s32.f32 %v1202
    %1205 = vmin.xlane.f32.xlu0 %v1204
    %v1206 = vpop.xlane.xlu0 %1205
    %vm1207 = vcmp.eq.f32.partialorder %v1204, %v1206
    %v1208 = vsel %vm1207, %v1203, inf
    %1209 = vmin.xlane.f32.xlu0 %v1208
    %v1210 = vpop.xlane.xlu0 %1209
    %v1211 = vcvt.f32.s32 %v1210
    %v1212 = vcvt.f32.s32 %v1206
    %v1213 = vshll.u32 %v1212, 16
    %v1214 = vadd.s32 %v1213, %v1211
    %v1215 = vlaneseq
    %v1216 = vshrl.u32 %v1215, 7
    %v1217 = vsub.s32 %v105, %v1216
    %v1218 = vrot.slane %v1214, %v1217
    %1219 = vst.msk [vmem:[#allocation11 + $0x5] sm:$0x1] %vm1049, %v1218
    %vm1220 = vcmp.eq.s32.totalorder %v1214, 3
    %v1221 = vsel %vm1220, 6, 7
    %vm1222 = vcmp.lt.s32.totalorder %v1189, %v1221
    %v1223 = vsel %vm1222, %v1189, %v1221
    %v1224 = vsub.f32 %v1006, %v1012
    %v1225 = vmul.f32 %v1224, 1.442695
    %v1226 = vpow.pop %v1225
    %1227 = vadd.xlane.f32.xlu0 %v1226
    %v1228 = vpop.xlane.xlu0 %1227
    %v1229 = vlog2.pop %v1228
    %v1230 = vmul.f32 %v1229, 0.6931472
    %v1231 = vsub.f32 %v1224, %v1230
    %s1232 = scalar_lea.vmem [#allocation10], 48
    %1233 = vst [vmem:[%s1232] sm:$0xff] %v1231
    %v1234 = vsel %vm1013, %v105, 128
    %v1235 = vand.u32 %v1234, 65535
    %v1236 = vshra.s32 %v1234, 16
    %v1237 = vcvt.s32.f32 %v1235
    %v1238 = vcvt.s32.f32 %v1236
    %1239 = vmin.xlane.f32.xlu0 %v1238
    %v1240 = vpop.xlane.xlu0 %1239
    %vm1241 = vcmp.eq.f32.partialorder %v1238, %v1240
    %v1242 = vsel %vm1241, %v1237, inf
    %1243 = vmin.xlane.f32.xlu0 %v1242
    %v1244 = vpop.xlane.xlu0 %1243
    %v1245 = vcvt.f32.s32 %v1244
    %v1246 = vcvt.f32.s32 %v1240
    %v1247 = vshll.u32 %v1246, 16
    %v1248 = vadd.s32 %v1247, %v1245
    %v1249 = vlaneseq
    %v1250 = vshrl.u32 %v1249, 7
    %v1251 = vsub.s32 %v105, %v1250
    %v1252 = vrot.slane %v1248, %v1251
    %1253 = vst.msk [vmem:[#allocation11 + $0x6] sm:$0x1] %vm1049, %v1252
    %vm1254 = vcmp.lt.s32.totalorder %v1223, 7
    %v1255 = vsel %vm1254, %v1223, 7
    %v1256 = vlaneseq
    %v1257 = vshrl.u32 %v1256, 7
    %v1258 = vsub.s32 %v105, %v1257
    %v1259 = vrot.slane %v1255, %v1258
    %1260 = vst.msk [vmem:[#allocation14] sm:$0x1] %vm1049, %v1259
    // Predicated region
    $region38: #{tpu_custom_call.1} parent=1 // pred_check
      _
    $region39: #{tpu_custom_call.1} parent=1 // pred_check_branch
      %1262 = sbr.rel (0) target = $region41
    $region40: #{tpu_custom_call.1} parent=1 // pred_region
      %s1264 = ssub.s32 896, 896
      %1265 = vsyncadd [#allocation4], %s1264
      %s1266 = sshll.u32 [#allocation10], 4
      %s1267 = int_to_ptr.vmem [resolvable:$true] %s1266
      %1272 = dma.vmem_to_hbm [thread:$0]  %s1267, 896, %s5, [#allocation4], 128, 128, 8
    $region41: #{tpu_custom_call.1} parent=1 // pred_fallthru
      _
    // Predicated region
    $region42: #{tpu_custom_call.1} parent=1 // pred_check
      _
    $region43: #{tpu_custom_call.1} parent=1 // pred_check_branch
      %1274 = sbr.rel (0) target = $region45
    $region44: #{tpu_custom_call.1} parent=1 // pred_region
      %s1276 = ssub.s32 128, 128
      %1277 = vsyncadd [#allocation12], %s1276
      %s1279 = sshll.u32 [#allocation11], 4
      %s1280 = int_to_ptr.vmem [resolvable:$true] %s1279
      %1282 = dma.vmem_to_hbm [thread:$0]  %s1280, 128, %s6, [#allocation12]
    $region45: #{tpu_custom_call.1} parent=1 // pred_fallthru
      _
    // Predicated region
    $region46: #{tpu_custom_call.1} parent=1 // pred_check
      _
    $region47: #{tpu_custom_call.1} parent=1 // pred_check_branch
      %1284 = sbr.rel (0) target = $region49
    $region48: #{tpu_custom_call.1} parent=1 // pred_region
      %s1286 = ssub.s32 128, 128
      %1287 = vsyncadd [#allocation12], %s1286
      %s1289 = sshll.u32 [#allocation13], 4
      %s1290 = int_to_ptr.vmem [resolvable:$true] %s1289
      %1292 = dma.vmem_to_hbm [thread:$0]  %s1290, 128, %s7, [#allocation12]
    $region49: #{tpu_custom_call.1} parent=1 // pred_fallthru
      _
    // Predicated region
    $region50: #{tpu_custom_call.1} parent=1 // pred_check
      _
    $region51: #{tpu_custom_call.1} parent=1 // pred_check_branch
      %1294 = sbr.rel (0) target = $region53
    $region52: #{tpu_custom_call.1} parent=1 // pred_region
      %s1296 = ssub.s32 16, 16
      %1297 = vsyncadd [#allocation15], %s1296
      %s1299 = sshll.u32 [#allocation14], 4
      %s1300 = int_to_ptr.vmem [resolvable:$true] %s1299
      %1302 = dma.vmem_to_hbm [thread:$0]  %s1300, 16, %s8, [#allocation15]
    $region53: #{tpu_custom_call.1} parent=1 // pred_fallthru
      _
    // Predicated region
    $region54: #{tpu_custom_call.1} parent=1 // pred_check
      _
    $region55: #{tpu_custom_call.1} parent=1 // pred_check_branch
      %1304 = sbr.rel (0) target = $region57
    $region56: #{tpu_custom_call.1} parent=1 // pred_region
      %1305 = dma.done [#allocation4], 896
    $region57: #{tpu_custom_call.1} parent=1 // pred_fallthru
      _
    // Predicated region
    $region58: #{tpu_custom_call.1} parent=1 // pred_check
      _
    $region59: #{tpu_custom_call.1} parent=1 // pred_check_branch
      %1307 = sbr.rel (0) target = $region61
    $region60: #{tpu_custom_call.1} parent=1 // pred_region
      %1308 = dma.done [#allocation12], 128
    $region61: #{tpu_custom_call.1} parent=1 // pred_fallthru
      _
    // Predicated region
    $region62: #{tpu_custom_call.1} parent=1 // pred_check
      _
    $region63: #{tpu_custom_call.1} parent=1 // pred_check_branch
      %1310 = sbr.rel (0) target = $region65
    $region64: #{tpu_custom_call.1} parent=1 // pred_region
      %1311 = dma.done [#allocation12], 128
    $region65: #{tpu_custom_call.1} parent=1 // pred_fallthru
      _
    // Predicated region
    $region66: #{tpu_custom_call.1} parent=1 // pred_check
      _
    $region67: #{tpu_custom_call.1} parent=1 // pred_check_branch
      %1313 = sbr.rel (0) target = $region69
    $region68: #{tpu_custom_call.1} parent=1 // pred_region
      %1314 = dma.done [#allocation15], 16
    $region69: #{tpu_custom_call.1} parent=1 // pred_fallthru
      _
    %1315 = vsyncpa [#allocation3], 1
    %1316 = vsyncpa [#allocation6], 1
    %1317 = vsyncpa [#allocation9], 1
    %1318 = vsyncpa [#allocation4], 1
    %1319 = vsyncpa [#allocation12], 1
    %1320 = vsyncpa [#allocation15], 1

</llo_original>
